<compile_context>
chip_gen: v6e
topology: v6e:2x2x1
jax: 0.10.0
libtpu: 0.0.40
codegen_flags: <defaults>
</compile_context>

<pallas_src>
import functools

import jax
import jax.numpy as jnp
from jax.experimental import pallas as pl
from jax.experimental.pallas import tpu as pltpu

BN_EPS = 1e-5


def _sent2featmap_kernel(x_ref, w_ref, gb_ref, o_ref):
    # x_ref:  (B, in_dim)       full batch (BN statistics need the whole batch)
    # w_ref:  (tile_n, in_dim)  row-block of the PyTorch-layout weight (out_dim, in_dim)
    # gb_ref: (2, tile_n)       row 0 = gamma, row 1 = beta (f32)
    # o_ref:  (B, tile_n)       output tile (lane-dense, tile_n multiple of 128)

    # Linear (bias omitted: it cancels exactly under training-mode BN).
    # Contract x's dim 1 with w's dim 1 -> (B, tile_n); f32 accumulation on the MXU.
    y = jax.lax.dot_general(
        x_ref[...],
        w_ref[...],
        dimension_numbers=(((1,), (1,)), ((), ())),
        preferred_element_type=jnp.float32,
    )

    # BatchNorm1d, training mode: one-pass batch statistics (f32).
    b_inv = jnp.float32(1.0 / y.shape[0])
    mean = jnp.sum(y, axis=0, keepdims=True) * b_inv
    ex2 = jnp.sum(y * y, axis=0, keepdims=True) * b_inv
    var = jnp.maximum(ex2 - mean * mean, 0.0)

    # Folded affine: out = y * scale + shift
    gb = gb_ref[...]
    scale = gb[0:1, :] * jax.lax.rsqrt(var + BN_EPS)
    shift = gb[1:2, :] - mean * scale

    # activ=None in this module config; an activation (if given) would be applied here.
    o_ref[...] = (y * scale + shift).astype(o_ref.dtype)


def _buffer_bytes(batch, in_dim, tn, x_bytes, w_bytes, out_bytes):
    """VMEM footprint for one grid step (default double-buffered pipeline + f32 temp)."""
    x_buf = 2 * batch * in_dim * x_bytes      # grid-invariant but still 2 buffers are held
    w_buf = 2 * tn * in_dim * w_bytes
    gb_buf = 2 * 2 * tn * 4
    o_buf = 2 * batch * tn * out_bytes
    y_tmp = batch * tn * 4                    # f32 matmul accumulator inside the body
    return x_buf + w_buf + gb_buf + o_buf + y_tmp


def _pick_tile(out_dim, in_dim, batch, x_bytes, w_bytes, out_bytes, budget_bytes,
               max_tile=8192):
    """Largest multiple of 128 that divides out_dim and fits the VMEM budget."""
    t = (min(out_dim, max_tile) // 128) * 128
    while t >= 128:
        if out_dim % t == 0 and _buffer_bytes(
                batch, in_dim, t, x_bytes, w_bytes, out_bytes) <= budget_bytes:
            return t
        t -= 128
    return out_dim  # small / odd out_dim: single full-width tile


def _grid_semantics():
    """CORE_PARALLEL on v7x (actually shards feature tiles across both TCs); else parallel."""
    try:
        kind = jax.devices()[0].device_kind.lower()
    except Exception:  # pragma: no cover
        kind = ""
    if "v7" in kind or "7x" in kind:
        return (pltpu.CORE_PARALLEL,)
    return ("parallel",)


def sent2featmap(x, weight, bias, gamma, beta, *, row, col, channel,
                 compute_dtype=jnp.bfloat16):
    """x: (B, in_dim); weight: (out_dim, in_dim) PyTorch layout; returns (B, channel, row, col).

    `bias` is accepted for API fidelity with nn.Linear but is mathematically cancelled by
    the training-mode BatchNorm1d that follows, so it is not streamed into the kernel.
    """
    B, in_dim = x.shape
    out_dim = row * col * channel
    assert weight.shape == (out_dim, in_dim)
    del bias  # cancels exactly: BN subtracts the per-feature batch mean

    out_dtype = x.dtype
    # Stream the big operands as bf16 (halves HBM bytes, full MXU rate); BN math stays f32.
    x_c = x.astype(compute_dtype)
    w_c = weight.astype(compute_dtype)
    gb = jnp.stack([gamma.astype(jnp.float32), beta.astype(jnp.float32)], axis=0)

    x_bytes = jnp.dtype(compute_dtype).itemsize
    w_bytes = jnp.dtype(compute_dtype).itemsize
    out_bytes = jnp.dtype(out_dtype).itemsize

    # Tile derived from a ~16 MiB footprint budget (safe on v7x's 64 MiB VMEM/TC).
    tn = _pick_tile(out_dim, in_dim, B, x_bytes, w_bytes, out_bytes,
                    budget_bytes=16 * 1024 * 1024)
    grid = (out_dim // tn,)

    need = _buffer_bytes(B, in_dim, tn, x_bytes, w_bytes, out_bytes)
    # ~2x actual buffer bytes, floored for compiler scratch, capped well below VMEM.
    vmem_limit = int(min(40 * 1024 * 1024, max(2 * need, 8 * 1024 * 1024)))

    bytes_accessed = (
        w_c.size * w_bytes            # weight streamed once
        + x_c.size * x_bytes          # x (grid-invariant, fetched once)
        + gb.size * 4
        + B * out_dim * out_bytes     # output
    )
    cost = pl.CostEstimate(
        flops=2 * B * in_dim * out_dim,
        transcendentals=out_dim,      # one rsqrt per feature
        bytes_accessed=int(bytes_accessed),
    )

    def _run(semantics):
        return pl.pallas_call(
            _sent2featmap_kernel,
            out_shape=jax.ShapeDtypeStruct((B, out_dim), out_dtype),
            grid_spec=pltpu.PrefetchScalarGridSpec(
                num_scalar_prefetch=0,
                grid=grid,
                in_specs=[
                    pl.BlockSpec((B, in_dim), lambda j: (0, 0)),   # x: full, grid-invariant
                    pl.BlockSpec((tn, in_dim), lambda j: (j, 0)),  # weight row-block
                    pl.BlockSpec((2, tn), lambda j: (0, j)),       # [gamma; beta] tile
                ],
                out_specs=pl.BlockSpec((B, tn), lambda j: (0, j)),
            ),
            compiler_params=pltpu.CompilerParams(
                dimension_semantics=semantics,
                vmem_limit_bytes=vmem_limit,
            ),
            cost_estimate=cost,
        )(x_c, w_c, gb)

    semantics = _grid_semantics()
    try:
        out_flat = _run(semantics)
    except Exception:
        if semantics == ("parallel",):
            raise
        out_flat = _run(("parallel",))  # defensive fallback if CORE_PARALLEL is rejected

    # Same semantics as torch: output.view(-1, channel, row, col)  (NCHW)
    return out_flat.reshape(B, channel, row, col)


def _reference(x, weight, bias, gamma, beta, *, row, col, channel, compute_dtype):
    # Matched-precision reference (same bf16 operand rounding as the kernel, f32 math).
    y = jnp.dot(x.astype(compute_dtype), weight.astype(compute_dtype).T,
                preferred_element_type=jnp.float32)
    y = y + bias.astype(jnp.float32)
    mean = jnp.mean(y, axis=0, keepdims=True)
    var = jnp.mean((y - mean) ** 2, axis=0, keepdims=True)
    y = (y - mean) * jax.lax.rsqrt(var + BN_EPS)
    y = y * gamma.astype(jnp.float32) + beta.astype(jnp.float32)
    return y.reshape(x.shape[0], channel, row, col).astype(x.dtype)


if __name__ == "__main__":
    # Small config consistent with the module: Sent2FeatMap(in_dim=32, row=8, col=8, channel=32)
    in_dim, row, col, channel = 32, 8, 8, 32
    out_dim = row * col * channel  # 2048 -> single lane-dense grid step at these shapes
    batch = 4

    key = jax.random.PRNGKey(0)
    kx, kw, kb, kg, kbeta = jax.random.split(key, 5)

    x = jax.random.normal(kx, (batch, in_dim), dtype=jnp.float32)
    # Deterministic synthetic parameters (not loaded from a checkpoint).
    weight = jax.random.normal(kw, (out_dim, in_dim), dtype=jnp.float32) * 0.05
    bias = jax.random.normal(kb, (out_dim,), dtype=jnp.float32) * 0.05
    gamma = 1.0 + 0.1 * jax.random.normal(kg, (out_dim,), dtype=jnp.float32)
    beta = 0.1 * jax.random.normal(kbeta, (out_dim,), dtype=jnp.float32)

    run = functools.partial(sent2featmap, row=row, col=col, channel=channel)
    out = jax.block_until_ready(run(x, weight, bias, gamma, beta))

    ref = _reference(x, weight, bias, gamma, beta, row=row, col=col, channel=channel,
                     compute_dtype=jnp.bfloat16)
    assert out.shape == (batch, channel, row, col)
    assert jnp.allclose(out, ref, atol=1e-2, rtol=1e-2), "mismatch vs reference"

    print("KERNEL_OK")
</pallas_src>

<mosaic_0001>
module attributes {stable_mosaic.version = 11 : i64} {
  func.func @_sent2featmap_kernel(%arg0: i32, %arg1: memref<4x32xbf16, #tpu.memory_space<vmem>>, %arg2: memref<2048x32xbf16, #tpu.memory_space<vmem>>, %arg3: memref<2x2048xf32, #tpu.memory_space<vmem>>, %arg4: memref<4x2048xf32, #tpu.memory_space<vmem>>) attributes {dimension_semantics = [#tpu.dimension_semantics<parallel>], iteration_bounds = array<i64: 1>, scalar_prefetch = 0 : i64, scratch_operands = 0 : i64, tpu.core_type = #tpu.core_type<tc>, window_params = [{pipeline_mode = #tpu.pipeline_mode<synchronous>, transform_indices = @transform_0, window_bounds = array<i64: 4, 32>}, {transform_indices = @transform_1, window_bounds = array<i64: 2048, 32>}, {transform_indices = @transform_2, window_bounds = array<i64: 2, 2048>}, {transform_indices = @transform_3, window_bounds = array<i64: 4, 2048>}]} {
    %c0 = arith.constant 0 : index
    %c0_0 = arith.constant 0 : index
    %0 = vector.load %arg1[%c0, %c0_0] : memref<4x32xbf16, #tpu.memory_space<vmem>>, vector<4x32xbf16>
    %c0_1 = arith.constant 0 : index
    %c0_2 = arith.constant 0 : index
    %1 = vector.load %arg2[%c0_1, %c0_2] : memref<2048x32xbf16, #tpu.memory_space<vmem>>, vector<2048x32xbf16>
    %cst = arith.constant dense<0.000000e+00> : vector<4x2048xf32>
    %2 = tpu.matmul %0, %1, %cst {dimension_numbers = #tpu.dot_dimension_numbers<[1], [1], [0], [0], [0, 0, 1, 0], [], []>} : vector<4x32xbf16>, vector<2048x32xbf16>, vector<4x2048xf32> -> vector<4x2048xf32>
    %cst_3 = arith.constant dense<0.000000e+00> : vector<2048xf32>
    %3 = vector.multi_reduction <add>, %2, %cst_3 [0] : vector<4x2048xf32> to vector<2048xf32>
    %4 = vector.shape_cast %3 : vector<2048xf32> to vector<1x2048xf32>
    %cst_4 = arith.constant 2.500000e-01 : f32
    %5 = vector.broadcast %cst_4 : f32 to vector<1x2048xf32>
    %6 = arith.mulf %4, %5 : vector<1x2048xf32>
    %7 = arith.mulf %2, %2 : vector<4x2048xf32>
    %cst_5 = arith.constant dense<0.000000e+00> : vector<2048xf32>
    %8 = vector.multi_reduction <add>, %7, %cst_5 [0] : vector<4x2048xf32> to vector<2048xf32>
    %9 = vector.shape_cast %8 : vector<2048xf32> to vector<1x2048xf32>
    %cst_6 = arith.constant 2.500000e-01 : f32
    %10 = vector.broadcast %cst_6 : f32 to vector<1x2048xf32>
    %11 = arith.mulf %9, %10 : vector<1x2048xf32>
    %12 = arith.mulf %6, %6 : vector<1x2048xf32>
    %13 = arith.subf %11, %12 : vector<1x2048xf32>
    %cst_7 = arith.constant 0.000000e+00 : f32
    %14 = vector.broadcast %cst_7 : f32 to vector<1x2048xf32>
    %15 = arith.maximumf %13, %14 : vector<1x2048xf32>
    %c0_8 = arith.constant 0 : index
    %c0_9 = arith.constant 0 : index
    %16 = vector.load %arg3[%c0_8, %c0_9] : memref<2x2048xf32, #tpu.memory_space<vmem>>, vector<2x2048xf32>
    %17 = vector.extract_strided_slice %16 {offsets = [0, 0], sizes = [1, 2048], strides = [1, 1]} : vector<2x2048xf32> to vector<1x2048xf32>
    %cst_10 = arith.constant 9.99999974E-6 : f32
    %18 = vector.broadcast %cst_10 : f32 to vector<1x2048xf32>
    %19 = arith.addf %15, %18 : vector<1x2048xf32>
    %20 = math.rsqrt %19 : vector<1x2048xf32>
    %21 = arith.mulf %17, %20 : vector<1x2048xf32>
    %22 = vector.extract_strided_slice %16 {offsets = [1, 0], sizes = [1, 2048], strides = [1, 1]} : vector<2x2048xf32> to vector<1x2048xf32>
    %23 = arith.mulf %6, %21 : vector<1x2048xf32>
    %24 = arith.subf %22, %23 : vector<1x2048xf32>
    %25 = vector.broadcast %21 : vector<1x2048xf32> to vector<4x2048xf32>
    %26 = arith.mulf %2, %25 : vector<4x2048xf32>
    %27 = vector.broadcast %24 : vector<1x2048xf32> to vector<4x2048xf32>
    %28 = arith.addf %26, %27 : vector<4x2048xf32>
    %c0_11 = arith.constant 0 : index
    %c0_12 = arith.constant 0 : index
    %29 = vector.load %arg4[%c0_11, %c0_12] : memref<4x2048xf32, #tpu.memory_space<vmem>>, vector<4x2048xf32>
    tpu.vector_store %arg4[%c0_11, %c0_12], %28 {strides = array<i32>} : memref<4x2048xf32, #tpu.memory_space<vmem>>, vector<4x2048xf32>,
    return
  }
  func.func @transform_0(%arg0: i32) -> (i32, i32) {
    %c0_i32 = arith.constant 0 : i32
    %c0_i32_0 = arith.constant 0 : i32
    %c0_i32_1 = arith.constant 0 : i32
    return %c0_i32, %c0_i32_0 : i32, i32
  }
  func.func @transform_1(%arg0: i32) -> (i32, i32) {
    %c0_i32 = arith.constant 0 : i32
    %c0_i32_0 = arith.constant 0 : i32
    return %arg0, %c0_i32 : i32, i32
  }
  func.func @transform_2(%arg0: i32) -> (i32, i32) {
    %c0_i32 = arith.constant 0 : i32
    %c0_i32_0 = arith.constant 0 : i32
    return %c0_i32, %arg0 : i32, i32
  }
  func.func @transform_3(%arg0: i32) -> (i32, i32) {
    %c0_i32 = arith.constant 0 : i32
    %c0_i32_0 = arith.constant 0 : i32
    return %c0_i32, %arg0 : i32, i32
  }
}

</mosaic_0001>

<llo_original>
// kernel: tpu_custom_call.1
$region0: #{tpu_custom_call.1}
  #allocation0 [shape = 'u32[]', space=smem, size = 0x4, offset = 0x4, fixed_abs, tag = 'smem constant byte address 0x4 - core index']
  #allocation1 [shape = 'u32[144,128]{1,0:T(1,128)}', space=vmem, size = 0x12000, scoped, tag = 'internal scratch']
  %s0 = inlined_call_operand.vmem [shape: bf16[4,32], index: 0, kind: input, shape index: {}]
  %s1 = inlined_call_operand.vmem [shape: bf16[2048,32], index: 1, kind: input, shape index: {}]
  %s2 = inlined_call_operand.vmem [shape: f32[2,2048], index: 2, kind: input, shape index: {}]
  %s3 = inlined_call_operand.hbm [shape: f32[4,2048], index: 3, kind: output, shape index: {}]
  %s4 = sld [smem:[#allocation0]]
  $region22: #{tpu_custom_call.1} parent=0
    _
  %s6 = ssub.s32 1, %s4
  %s7 = scalar_select 0, %s6, %s4
  $region1: #{tpu_custom_call.1} parent=0
    #allocation2 [shape = 'u8[32768]{0}', space=vmem, size = 0x8000, scoped, tag = 'output window, operand 0, single buffered']
    #allocation3 [shape = 's32[1]{0}', space=sflag, size = 0x4, scoped, tag = 'scoped memory for tpu_custom_call.1']
    %8 = vsyncpa [#allocation3], 0
    // Predicated region
    $region2: #{tpu_custom_call.1} parent=1 // pred_check
      _
    $region3: #{tpu_custom_call.1} parent=1 // pred_check_branch
      %10 = sbr.rel (0) target = $region5
    $region4: #{tpu_custom_call.1} parent=1 // pred_region
      _
    $region5: #{tpu_custom_call.1} parent=1 // pred_fallthru
      _
    // Predicated region
    $region6: #{tpu_custom_call.1} parent=1 // pred_check
      _
    $region7: #{tpu_custom_call.1} parent=1 // pred_check_branch
      %12 = sbr.rel (0) target = $region9
    $region8: #{tpu_custom_call.1} parent=1 // pred_region
      _
    $region9: #{tpu_custom_call.1} parent=1 // pred_fallthru
      _
    // Predicated region
    $region10: #{tpu_custom_call.1} parent=1 // pred_check
      _
    $region11: #{tpu_custom_call.1} parent=1 // pred_check_branch
      %14 = sbr.rel (0) target = $region13
    $region12: #{tpu_custom_call.1} parent=1 // pred_region
      _
    $region13: #{tpu_custom_call.1} parent=1 // pred_fallthru
      _
    %v16 = vld [vmem:[%s0] sm:$0x3]
    %v17 = vld [vmem:[%s1] sm:$0xf]
    %v18 = vld [vmem:[%s1 + $0x4] sm:$0xf]
    %v19 = vld [vmem:[%s1 + $0x8] sm:$0xf]
    %v20 = vld [vmem:[%s1 + $0xc] sm:$0xf]
    %v21 = vld [vmem:[%s1 + $0x10] sm:$0xf]
    %v22 = vld [vmem:[%s1 + $0x14] sm:$0xf]
    %v23 = vld [vmem:[%s1 + $0x18] sm:$0xf]
    %v24 = vld [vmem:[%s1 + $0x1c] sm:$0xf]
    %v25 = vld [vmem:[%s1 + $0x20] sm:$0xf]
    %v26 = vld [vmem:[%s1 + $0x24] sm:$0xf]
    %v27 = vld [vmem:[%s1 + $0x28] sm:$0xf]
    %v28 = vld [vmem:[%s1 + $0x2c] sm:$0xf]
    %v29 = vld [vmem:[%s1 + $0x30] sm:$0xf]
    %v30 = vld [vmem:[%s1 + $0x34] sm:$0xf]
    %v31 = vld [vmem:[%s1 + $0x38] sm:$0xf]
    %v32 = vld [vmem:[%s1 + $0x3c] sm:$0xf]
    %v33 = vld [vmem:[%s1 + $0x40] sm:$0xf]
    %v34 = vld [vmem:[%s1 + $0x44] sm:$0xf]
    %v35 = vld [vmem:[%s1 + $0x48] sm:$0xf]
    %v36 = vld [vmem:[%s1 + $0x4c] sm:$0xf]
    %v37 = vld [vmem:[%s1 + $0x50] sm:$0xf]
    %v38 = vld [vmem:[%s1 + $0x54] sm:$0xf]
    %v39 = vld [vmem:[%s1 + $0x58] sm:$0xf]
    %v40 = vld [vmem:[%s1 + $0x5c] sm:$0xf]
    %v41 = vld [vmem:[%s1 + $0x60] sm:$0xf]
    %v42 = vld [vmem:[%s1 + $0x64] sm:$0xf]
    %v43 = vld [vmem:[%s1 + $0x68] sm:$0xf]
    %v44 = vld [vmem:[%s1 + $0x6c] sm:$0xf]
    %v45 = vld [vmem:[%s1 + $0x70] sm:$0xf]
    %v46 = vld [vmem:[%s1 + $0x74] sm:$0xf]
    %v47 = vld [vmem:[%s1 + $0x78] sm:$0xf]
    %v48 = vld [vmem:[%s1 + $0x7c] sm:$0xf]
    %v49 = vld [vmem:[%s1 + $0x80] sm:$0xf]
    %v50 = vld [vmem:[%s1 + $0x84] sm:$0xf]
    %v51 = vld [vmem:[%s1 + $0x88] sm:$0xf]
    %v52 = vld [vmem:[%s1 + $0x8c] sm:$0xf]
    %v53 = vld [vmem:[%s1 + $0x90] sm:$0xf]
    %v54 = vld [vmem:[%s1 + $0x94] sm:$0xf]
    %v55 = vld [vmem:[%s1 + $0x98] sm:$0xf]
    %v56 = vld [vmem:[%s1 + $0x9c] sm:$0xf]
    %v57 = vld [vmem:[%s1 + $0xa0] sm:$0xf]
    %v58 = vld [vmem:[%s1 + $0xa4] sm:$0xf]
    %v59 = vld [vmem:[%s1 + $0xa8] sm:$0xf]
    %v60 = vld [vmem:[%s1 + $0xac] sm:$0xf]
    %v61 = vld [vmem:[%s1 + $0xb0] sm:$0xf]
    %v62 = vld [vmem:[%s1 + $0xb4] sm:$0xf]
    %v63 = vld [vmem:[%s1 + $0xb8] sm:$0xf]
    %v64 = vld [vmem:[%s1 + $0xbc] sm:$0xf]
    %v65 = vld [vmem:[%s1 + $0xc0] sm:$0xf]
    %v66 = vld [vmem:[%s1 + $0xc4] sm:$0xf]
    %v67 = vld [vmem:[%s1 + $0xc8] sm:$0xf]
    %v68 = vld [vmem:[%s1 + $0xcc] sm:$0xf]
    %v69 = vld [vmem:[%s1 + $0xd0] sm:$0xf]
    %v70 = vld [vmem:[%s1 + $0xd4] sm:$0xf]
    %v71 = vld [vmem:[%s1 + $0xd8] sm:$0xf]
    %v72 = vld [vmem:[%s1 + $0xdc] sm:$0xf]
    %v73 = vld [vmem:[%s1 + $0xe0] sm:$0xf]
    %v74 = vld [vmem:[%s1 + $0xe4] sm:$0xf]
    %v75 = vld [vmem:[%s1 + $0xe8] sm:$0xf]
    %v76 = vld [vmem:[%s1 + $0xec] sm:$0xf]
    %v77 = vld [vmem:[%s1 + $0xf0] sm:$0xf]
    %v78 = vld [vmem:[%s1 + $0xf4] sm:$0xf]
    %v79 = vld [vmem:[%s1 + $0xf8] sm:$0xf]
    %v80 = vld [vmem:[%s1 + $0xfc] sm:$0xf]
    %v81 = vld [vmem:[%s1 + $0x100] sm:$0xf]
    %v82 = vld [vmem:[%s1 + $0x104] sm:$0xf]
    %v83 = vld [vmem:[%s1 + $0x108] sm:$0xf]
    %v84 = vld [vmem:[%s1 + $0x10c] sm:$0xf]
    %v85 = vld [vmem:[%s1 + $0x110] sm:$0xf]
    %v86 = vld [vmem:[%s1 + $0x114] sm:$0xf]
    %v87 = vld [vmem:[%s1 + $0x118] sm:$0xf]
    %v88 = vld [vmem:[%s1 + $0x11c] sm:$0xf]
    %v89 = vld [vmem:[%s1 + $0x120] sm:$0xf]
    %v90 = vld [vmem:[%s1 + $0x124] sm:$0xf]
    %v91 = vld [vmem:[%s1 + $0x128] sm:$0xf]
    %v92 = vld [vmem:[%s1 + $0x12c] sm:$0xf]
    %v93 = vld [vmem:[%s1 + $0x130] sm:$0xf]
    %v94 = vld [vmem:[%s1 + $0x134] sm:$0xf]
    %v95 = vld [vmem:[%s1 + $0x138] sm:$0xf]
    %v96 = vld [vmem:[%s1 + $0x13c] sm:$0xf]
    %v97 = vld [vmem:[%s1 + $0x140] sm:$0xf]
    %v98 = vld [vmem:[%s1 + $0x144] sm:$0xf]
    %v99 = vld [vmem:[%s1 + $0x148] sm:$0xf]
    %v100 = vld [vmem:[%s1 + $0x14c] sm:$0xf]
    %v101 = vld [vmem:[%s1 + $0x150] sm:$0xf]
    %v102 = vld [vmem:[%s1 + $0x154] sm:$0xf]
    %v103 = vld [vmem:[%s1 + $0x158] sm:$0xf]
    %v104 = vld [vmem:[%s1 + $0x15c] sm:$0xf]
    %v105 = vld [vmem:[%s1 + $0x160] sm:$0xf]
    %v106 = vld [vmem:[%s1 + $0x164] sm:$0xf]
    %v107 = vld [vmem:[%s1 + $0x168] sm:$0xf]
    %v108 = vld [vmem:[%s1 + $0x16c] sm:$0xf]
    %v109 = vld [vmem:[%s1 + $0x170] sm:$0xf]
    %v110 = vld [vmem:[%s1 + $0x174] sm:$0xf]
    %v111 = vld [vmem:[%s1 + $0x178] sm:$0xf]
    %v112 = vld [vmem:[%s1 + $0x17c] sm:$0xf]
    %v113 = vld [vmem:[%s1 + $0x180] sm:$0xf]
    %v114 = vld [vmem:[%s1 + $0x184] sm:$0xf]
    %v115 = vld [vmem:[%s1 + $0x188] sm:$0xf]
    %v116 = vld [vmem:[%s1 + $0x18c] sm:$0xf]
    %v117 = vld [vmem:[%s1 + $0x190] sm:$0xf]
    %v118 = vld [vmem:[%s1 + $0x194] sm:$0xf]
    %v119 = vld [vmem:[%s1 + $0x198] sm:$0xf]
    %v120 = vld [vmem:[%s1 + $0x19c] sm:$0xf]
    %v121 = vld [vmem:[%s1 + $0x1a0] sm:$0xf]
    %v122 = vld [vmem:[%s1 + $0x1a4] sm:$0xf]
    %v123 = vld [vmem:[%s1 + $0x1a8] sm:$0xf]
    %v124 = vld [vmem:[%s1 + $0x1ac] sm:$0xf]
    %v125 = vld [vmem:[%s1 + $0x1b0] sm:$0xf]
    %v126 = vld [vmem:[%s1 + $0x1b4] sm:$0xf]
    %v127 = vld [vmem:[%s1 + $0x1b8] sm:$0xf]
    %v128 = vld [vmem:[%s1 + $0x1bc] sm:$0xf]
    %v129 = vld [vmem:[%s1 + $0x1c0] sm:$0xf]
    %v130 = vld [vmem:[%s1 + $0x1c4] sm:$0xf]
    %v131 = vld [vmem:[%s1 + $0x1c8] sm:$0xf]
    %v132 = vld [vmem:[%s1 + $0x1cc] sm:$0xf]
    %v133 = vld [vmem:[%s1 + $0x1d0] sm:$0xf]
    %v134 = vld [vmem:[%s1 + $0x1d4] sm:$0xf]
    %v135 = vld [vmem:[%s1 + $0x1d8] sm:$0xf]
    %v136 = vld [vmem:[%s1 + $0x1dc] sm:$0xf]
    %v137 = vld [vmem:[%s1 + $0x1e0] sm:$0xf]
    %v138 = vld [vmem:[%s1 + $0x1e4] sm:$0xf]
    %v139 = vld [vmem:[%s1 + $0x1e8] sm:$0xf]
    %v140 = vld [vmem:[%s1 + $0x1ec] sm:$0xf]
    %v141 = vld [vmem:[%s1 + $0x1f0] sm:$0xf]
    %v142 = vld [vmem:[%s1 + $0x1f4] sm:$0xf]
    %v143 = vld [vmem:[%s1 + $0x1f8] sm:$0xf]
    %v144 = vld [vmem:[%s1 + $0x1fc] sm:$0xf]
    %v145 = vld [vmem:[%s1 + $0x200] sm:$0xf]
    %v146 = vld [vmem:[%s1 + $0x204] sm:$0xf]
    %v147 = vld [vmem:[%s1 + $0x208] sm:$0xf]
    %v148 = vld [vmem:[%s1 + $0x20c] sm:$0xf]
    %v149 = vld [vmem:[%s1 + $0x210] sm:$0xf]
    %v150 = vld [vmem:[%s1 + $0x214] sm:$0xf]
    %v151 = vld [vmem:[%s1 + $0x218] sm:$0xf]
    %v152 = vld [vmem:[%s1 + $0x21c] sm:$0xf]
    %v153 = vld [vmem:[%s1 + $0x220] sm:$0xf]
    %v154 = vld [vmem:[%s1 + $0x224] sm:$0xf]
    %v155 = vld [vmem:[%s1 + $0x228] sm:$0xf]
    %v156 = vld [vmem:[%s1 + $0x22c] sm:$0xf]
    %v157 = vld [vmem:[%s1 + $0x230] sm:$0xf]
    %v158 = vld [vmem:[%s1 + $0x234] sm:$0xf]
    %v159 = vld [vmem:[%s1 + $0x238] sm:$0xf]
    %v160 = vld [vmem:[%s1 + $0x23c] sm:$0xf]
    %v161 = vld [vmem:[%s1 + $0x240] sm:$0xf]
    %v162 = vld [vmem:[%s1 + $0x244] sm:$0xf]
    %v163 = vld [vmem:[%s1 + $0x248] sm:$0xf]
    %v164 = vld [vmem:[%s1 + $0x24c] sm:$0xf]
    %v165 = vld [vmem:[%s1 + $0x250] sm:$0xf]
    %v166 = vld [vmem:[%s1 + $0x254] sm:$0xf]
    %v167 = vld [vmem:[%s1 + $0x258] sm:$0xf]
    %v168 = vld [vmem:[%s1 + $0x25c] sm:$0xf]
    %v169 = vld [vmem:[%s1 + $0x260] sm:$0xf]
    %v170 = vld [vmem:[%s1 + $0x264] sm:$0xf]
    %v171 = vld [vmem:[%s1 + $0x268] sm:$0xf]
    %v172 = vld [vmem:[%s1 + $0x26c] sm:$0xf]
    %v173 = vld [vmem:[%s1 + $0x270] sm:$0xf]
    %v174 = vld [vmem:[%s1 + $0x274] sm:$0xf]
    %v175 = vld [vmem:[%s1 + $0x278] sm:$0xf]
    %v176 = vld [vmem:[%s1 + $0x27c] sm:$0xf]
    %v177 = vld [vmem:[%s1 + $0x280] sm:$0xf]
    %v178 = vld [vmem:[%s1 + $0x284] sm:$0xf]
    %v179 = vld [vmem:[%s1 + $0x288] sm:$0xf]
    %v180 = vld [vmem:[%s1 + $0x28c] sm:$0xf]
    %v181 = vld [vmem:[%s1 + $0x290] sm:$0xf]
    %v182 = vld [vmem:[%s1 + $0x294] sm:$0xf]
    %v183 = vld [vmem:[%s1 + $0x298] sm:$0xf]
    %v184 = vld [vmem:[%s1 + $0x29c] sm:$0xf]
    %v185 = vld [vmem:[%s1 + $0x2a0] sm:$0xf]
    %v186 = vld [vmem:[%s1 + $0x2a4] sm:$0xf]
    %v187 = vld [vmem:[%s1 + $0x2a8] sm:$0xf]
    %v188 = vld [vmem:[%s1 + $0x2ac] sm:$0xf]
    %v189 = vld [vmem:[%s1 + $0x2b0] sm:$0xf]
    %v190 = vld [vmem:[%s1 + $0x2b4] sm:$0xf]
    %v191 = vld [vmem:[%s1 + $0x2b8] sm:$0xf]
    %v192 = vld [vmem:[%s1 + $0x2bc] sm:$0xf]
    %v193 = vld [vmem:[%s1 + $0x2c0] sm:$0xf]
    %v194 = vld [vmem:[%s1 + $0x2c4] sm:$0xf]
    %v195 = vld [vmem:[%s1 + $0x2c8] sm:$0xf]
    %v196 = vld [vmem:[%s1 + $0x2cc] sm:$0xf]
    %v197 = vld [vmem:[%s1 + $0x2d0] sm:$0xf]
    %v198 = vld [vmem:[%s1 + $0x2d4] sm:$0xf]
    %v199 = vld [vmem:[%s1 + $0x2d8] sm:$0xf]
    %v200 = vld [vmem:[%s1 + $0x2dc] sm:$0xf]
    %v201 = vld [vmem:[%s1 + $0x2e0] sm:$0xf]
    %v202 = vld [vmem:[%s1 + $0x2e4] sm:$0xf]
    %v203 = vld [vmem:[%s1 + $0x2e8] sm:$0xf]
    %v204 = vld [vmem:[%s1 + $0x2ec] sm:$0xf]
    %v205 = vld [vmem:[%s1 + $0x2f0] sm:$0xf]
    %v206 = vld [vmem:[%s1 + $0x2f4] sm:$0xf]
    %v207 = vld [vmem:[%s1 + $0x2f8] sm:$0xf]
    %v208 = vld [vmem:[%s1 + $0x2fc] sm:$0xf]
    %v209 = vld [vmem:[%s1 + $0x300] sm:$0xf]
    %v210 = vld [vmem:[%s1 + $0x304] sm:$0xf]
    %v211 = vld [vmem:[%s1 + $0x308] sm:$0xf]
    %v212 = vld [vmem:[%s1 + $0x30c] sm:$0xf]
    %v213 = vld [vmem:[%s1 + $0x310] sm:$0xf]
    %v214 = vld [vmem:[%s1 + $0x314] sm:$0xf]
    %v215 = vld [vmem:[%s1 + $0x318] sm:$0xf]
    %v216 = vld [vmem:[%s1 + $0x31c] sm:$0xf]
    %v217 = vld [vmem:[%s1 + $0x320] sm:$0xf]
    %v218 = vld [vmem:[%s1 + $0x324] sm:$0xf]
    %v219 = vld [vmem:[%s1 + $0x328] sm:$0xf]
    %v220 = vld [vmem:[%s1 + $0x32c] sm:$0xf]
    %v221 = vld [vmem:[%s1 + $0x330] sm:$0xf]
    %v222 = vld [vmem:[%s1 + $0x334] sm:$0xf]
    %v223 = vld [vmem:[%s1 + $0x338] sm:$0xf]
    %v224 = vld [vmem:[%s1 + $0x33c] sm:$0xf]
    %v225 = vld [vmem:[%s1 + $0x340] sm:$0xf]
    %v226 = vld [vmem:[%s1 + $0x344] sm:$0xf]
    %v227 = vld [vmem:[%s1 + $0x348] sm:$0xf]
    %v228 = vld [vmem:[%s1 + $0x34c] sm:$0xf]
    %v229 = vld [vmem:[%s1 + $0x350] sm:$0xf]
    %v230 = vld [vmem:[%s1 + $0x354] sm:$0xf]
    %v231 = vld [vmem:[%s1 + $0x358] sm:$0xf]
    %v232 = vld [vmem:[%s1 + $0x35c] sm:$0xf]
    %v233 = vld [vmem:[%s1 + $0x360] sm:$0xf]
    %v234 = vld [vmem:[%s1 + $0x364] sm:$0xf]
    %v235 = vld [vmem:[%s1 + $0x368] sm:$0xf]
    %v236 = vld [vmem:[%s1 + $0x36c] sm:$0xf]
    %v237 = vld [vmem:[%s1 + $0x370] sm:$0xf]
    %v238 = vld [vmem:[%s1 + $0x374] sm:$0xf]
    %v239 = vld [vmem:[%s1 + $0x378] sm:$0xf]
    %v240 = vld [vmem:[%s1 + $0x37c] sm:$0xf]
    %v241 = vld [vmem:[%s1 + $0x380] sm:$0xf]
    %v242 = vld [vmem:[%s1 + $0x384] sm:$0xf]
    %v243 = vld [vmem:[%s1 + $0x388] sm:$0xf]
    %v244 = vld [vmem:[%s1 + $0x38c] sm:$0xf]
    %v245 = vld [vmem:[%s1 + $0x390] sm:$0xf]
    %v246 = vld [vmem:[%s1 + $0x394] sm:$0xf]
    %v247 = vld [vmem:[%s1 + $0x398] sm:$0xf]
    %v248 = vld [vmem:[%s1 + $0x39c] sm:$0xf]
    %v249 = vld [vmem:[%s1 + $0x3a0] sm:$0xf]
    %v250 = vld [vmem:[%s1 + $0x3a4] sm:$0xf]
    %v251 = vld [vmem:[%s1 + $0x3a8] sm:$0xf]
    %v252 = vld [vmem:[%s1 + $0x3ac] sm:$0xf]
    %v253 = vld [vmem:[%s1 + $0x3b0] sm:$0xf]
    %v254 = vld [vmem:[%s1 + $0x3b4] sm:$0xf]
    %v255 = vld [vmem:[%s1 + $0x3b8] sm:$0xf]
    %v256 = vld [vmem:[%s1 + $0x3bc] sm:$0xf]
    %v257 = vld [vmem:[%s1 + $0x3c0] sm:$0xf]
    %v258 = vld [vmem:[%s1 + $0x3c4] sm:$0xf]
    %v259 = vld [vmem:[%s1 + $0x3c8] sm:$0xf]
    %v260 = vld [vmem:[%s1 + $0x3cc] sm:$0xf]
    %v261 = vld [vmem:[%s1 + $0x3d0] sm:$0xf]
    %v262 = vld [vmem:[%s1 + $0x3d4] sm:$0xf]
    %v263 = vld [vmem:[%s1 + $0x3d8] sm:$0xf]
    %v264 = vld [vmem:[%s1 + $0x3dc] sm:$0xf]
    %v265 = vld [vmem:[%s1 + $0x3e0] sm:$0xf]
    %v266 = vld [vmem:[%s1 + $0x3e4] sm:$0xf]
    %v267 = vld [vmem:[%s1 + $0x3e8] sm:$0xf]
    %v268 = vld [vmem:[%s1 + $0x3ec] sm:$0xf]
    %v269 = vld [vmem:[%s1 + $0x3f0] sm:$0xf]
    %v270 = vld [vmem:[%s1 + $0x3f4] sm:$0xf]
    %v271 = vld [vmem:[%s1 + $0x3f8] sm:$0xf]
    %v272 = vld [vmem:[%s1 + $0x3fc] sm:$0xf]
    %v529 = vunpack.c.l.b16 %v17
    %v530 = vunpack.c.l.b16 %v18
    %v531 = vunpack.c.l.b16 %v19
    %v532 = vunpack.c.l.b16 %v20
    %v533 = vunpack.c.l.b16 %v21
    %v534 = vunpack.c.l.b16 %v22
    %v535 = vunpack.c.l.b16 %v23
    %v536 = vunpack.c.l.b16 %v24
    %v537 = vunpack.c.l.b16 %v25
    %v538 = vunpack.c.l.b16 %v26
    %v539 = vunpack.c.l.b16 %v27
    %v540 = vunpack.c.l.b16 %v28
    %v541 = vunpack.c.l.b16 %v29
    %v542 = vunpack.c.l.b16 %v30
    %v543 = vunpack.c.l.b16 %v31
    %v544 = vunpack.c.l.b16 %v32
    %v545 = vunpack.c.l.b16 %v33
    %v546 = vunpack.c.l.b16 %v34
    %v547 = vunpack.c.l.b16 %v35
    %v548 = vunpack.c.l.b16 %v36
    %v549 = vunpack.c.l.b16 %v37
    %v550 = vunpack.c.l.b16 %v38
    %v551 = vunpack.c.l.b16 %v39
    %v552 = vunpack.c.l.b16 %v40
    %v553 = vunpack.c.l.b16 %v41
    %v554 = vunpack.c.l.b16 %v42
    %v555 = vunpack.c.l.b16 %v43
    %v556 = vunpack.c.l.b16 %v44
    %v557 = vunpack.c.l.b16 %v45
    %v558 = vunpack.c.l.b16 %v46
    %v559 = vunpack.c.l.b16 %v47
    %v560 = vunpack.c.l.b16 %v48
    %v561 = vunpack.c.l.b16 %v49
    %v562 = vunpack.c.l.b16 %v50
    %v563 = vunpack.c.l.b16 %v51
    %v564 = vunpack.c.l.b16 %v52
    %v565 = vunpack.c.l.b16 %v53
    %v566 = vunpack.c.l.b16 %v54
    %v567 = vunpack.c.l.b16 %v55
    %v568 = vunpack.c.l.b16 %v56
    %v569 = vunpack.c.l.b16 %v57
    %v570 = vunpack.c.l.b16 %v58
    %v571 = vunpack.c.l.b16 %v59
    %v572 = vunpack.c.l.b16 %v60
    %v573 = vunpack.c.l.b16 %v61
    %v574 = vunpack.c.l.b16 %v62
    %v575 = vunpack.c.l.b16 %v63
    %v576 = vunpack.c.l.b16 %v64
    %v577 = vunpack.c.l.b16 %v65
    %v578 = vunpack.c.l.b16 %v66
    %v579 = vunpack.c.l.b16 %v67
    %v580 = vunpack.c.l.b16 %v68
    %v581 = vunpack.c.l.b16 %v69
    %v582 = vunpack.c.l.b16 %v70
    %v583 = vunpack.c.l.b16 %v71
    %v584 = vunpack.c.l.b16 %v72
    %v585 = vunpack.c.l.b16 %v73
    %v586 = vunpack.c.l.b16 %v74
    %v587 = vunpack.c.l.b16 %v75
    %v588 = vunpack.c.l.b16 %v76
    %v589 = vunpack.c.l.b16 %v77
    %v590 = vunpack.c.l.b16 %v78
    %v591 = vunpack.c.l.b16 %v79
    %v592 = vunpack.c.l.b16 %v80
    %v593 = vunpack.c.l.b16 %v81
    %v594 = vunpack.c.l.b16 %v82
    %v595 = vunpack.c.l.b16 %v83
    %v596 = vunpack.c.l.b16 %v84
    %v597 = vunpack.c.l.b16 %v85
    %v598 = vunpack.c.l.b16 %v86
    %v599 = vunpack.c.l.b16 %v87
    %v600 = vunpack.c.l.b16 %v88
    %v601 = vunpack.c.l.b16 %v89
    %v602 = vunpack.c.l.b16 %v90
    %v603 = vunpack.c.l.b16 %v91
    %v604 = vunpack.c.l.b16 %v92
    %v605 = vunpack.c.l.b16 %v93
    %v606 = vunpack.c.l.b16 %v94
    %v607 = vunpack.c.l.b16 %v95
    %v608 = vunpack.c.l.b16 %v96
    %v609 = vunpack.c.l.b16 %v97
    %v610 = vunpack.c.l.b16 %v98
    %v611 = vunpack.c.l.b16 %v99
    %v612 = vunpack.c.l.b16 %v100
    %v613 = vunpack.c.l.b16 %v101
    %v614 = vunpack.c.l.b16 %v102
    %v615 = vunpack.c.l.b16 %v103
    %v616 = vunpack.c.l.b16 %v104
    %v617 = vunpack.c.l.b16 %v105
    %v618 = vunpack.c.l.b16 %v106
    %v619 = vunpack.c.l.b16 %v107
    %v620 = vunpack.c.l.b16 %v108
    %v621 = vunpack.c.l.b16 %v109
    %v622 = vunpack.c.l.b16 %v110
    %v623 = vunpack.c.l.b16 %v111
    %v624 = vunpack.c.l.b16 %v112
    %v625 = vunpack.c.l.b16 %v113
    %v626 = vunpack.c.l.b16 %v114
    %v627 = vunpack.c.l.b16 %v115
    %v628 = vunpack.c.l.b16 %v116
    %v629 = vunpack.c.l.b16 %v117
    %v630 = vunpack.c.l.b16 %v118
    %v631 = vunpack.c.l.b16 %v119
    %v632 = vunpack.c.l.b16 %v120
    %v633 = vunpack.c.l.b16 %v121
    %v634 = vunpack.c.l.b16 %v122
    %v635 = vunpack.c.l.b16 %v123
    %v636 = vunpack.c.l.b16 %v124
    %v637 = vunpack.c.l.b16 %v125
    %v638 = vunpack.c.l.b16 %v126
    %v639 = vunpack.c.l.b16 %v127
    %v640 = vunpack.c.l.b16 %v128
    %v641 = vunpack.c.l.b16 %v129
    %v642 = vunpack.c.l.b16 %v130
    %v643 = vunpack.c.l.b16 %v131
    %v644 = vunpack.c.l.b16 %v132
    %v645 = vunpack.c.l.b16 %v133
    %v646 = vunpack.c.l.b16 %v134
    %v647 = vunpack.c.l.b16 %v135
    %v648 = vunpack.c.l.b16 %v136
    %v649 = vunpack.c.l.b16 %v137
    %v650 = vunpack.c.l.b16 %v138
    %v651 = vunpack.c.l.b16 %v139
    %v652 = vunpack.c.l.b16 %v140
    %v653 = vunpack.c.l.b16 %v141
    %v654 = vunpack.c.l.b16 %v142
    %v655 = vunpack.c.l.b16 %v143
    %v656 = vunpack.c.l.b16 %v144
    %v657 = vunpack.c.l.b16 %v145
    %v658 = vunpack.c.l.b16 %v146
    %v659 = vunpack.c.l.b16 %v147
    %v660 = vunpack.c.l.b16 %v148
    %v661 = vunpack.c.l.b16 %v149
    %v662 = vunpack.c.l.b16 %v150
    %v663 = vunpack.c.l.b16 %v151
    %v664 = vunpack.c.l.b16 %v152
    %v665 = vunpack.c.l.b16 %v153
    %v666 = vunpack.c.l.b16 %v154
    %v667 = vunpack.c.l.b16 %v155
    %v668 = vunpack.c.l.b16 %v156
    %v669 = vunpack.c.l.b16 %v157
    %v670 = vunpack.c.l.b16 %v158
    %v671 = vunpack.c.l.b16 %v159
    %v672 = vunpack.c.l.b16 %v160
    %v673 = vunpack.c.l.b16 %v161
    %v674 = vunpack.c.l.b16 %v162
    %v675 = vunpack.c.l.b16 %v163
    %v676 = vunpack.c.l.b16 %v164
    %v677 = vunpack.c.l.b16 %v165
    %v678 = vunpack.c.l.b16 %v166
    %v679 = vunpack.c.l.b16 %v167
    %v680 = vunpack.c.l.b16 %v168
    %v681 = vunpack.c.l.b16 %v169
    %v682 = vunpack.c.l.b16 %v170
    %v683 = vunpack.c.l.b16 %v171
    %v684 = vunpack.c.l.b16 %v172
    %v685 = vunpack.c.l.b16 %v173
    %v686 = vunpack.c.l.b16 %v174
    %v687 = vunpack.c.l.b16 %v175
    %v688 = vunpack.c.l.b16 %v176
    %v689 = vunpack.c.l.b16 %v177
    %v690 = vunpack.c.l.b16 %v178
    %v691 = vunpack.c.l.b16 %v179
    %v692 = vunpack.c.l.b16 %v180
    %v693 = vunpack.c.l.b16 %v181
    %v694 = vunpack.c.l.b16 %v182
    %v695 = vunpack.c.l.b16 %v183
    %v696 = vunpack.c.l.b16 %v184
    %v697 = vunpack.c.l.b16 %v185
    %v698 = vunpack.c.l.b16 %v186
    %v699 = vunpack.c.l.b16 %v187
    %v700 = vunpack.c.l.b16 %v188
    %v701 = vunpack.c.l.b16 %v189
    %v702 = vunpack.c.l.b16 %v190
    %v703 = vunpack.c.l.b16 %v191
    %v704 = vunpack.c.l.b16 %v192
    %v705 = vunpack.c.l.b16 %v193
    %v706 = vunpack.c.l.b16 %v194
    %v707 = vunpack.c.l.b16 %v195
    %v708 = vunpack.c.l.b16 %v196
    %v709 = vunpack.c.l.b16 %v197
    %v710 = vunpack.c.l.b16 %v198
    %v711 = vunpack.c.l.b16 %v199
    %v712 = vunpack.c.l.b16 %v200
    %v713 = vunpack.c.l.b16 %v201
    %v714 = vunpack.c.l.b16 %v202
    %v715 = vunpack.c.l.b16 %v203
    %v716 = vunpack.c.l.b16 %v204
    %v717 = vunpack.c.l.b16 %v205
    %v718 = vunpack.c.l.b16 %v206
    %v719 = vunpack.c.l.b16 %v207
    %v720 = vunpack.c.l.b16 %v208
    %v721 = vunpack.c.l.b16 %v209
    %v722 = vunpack.c.l.b16 %v210
    %v723 = vunpack.c.l.b16 %v211
    %v724 = vunpack.c.l.b16 %v212
    %v725 = vunpack.c.l.b16 %v213
    %v726 = vunpack.c.l.b16 %v214
    %v727 = vunpack.c.l.b16 %v215
    %v728 = vunpack.c.l.b16 %v216
    %v729 = vunpack.c.l.b16 %v217
    %v730 = vunpack.c.l.b16 %v218
    %v731 = vunpack.c.l.b16 %v219
    %v732 = vunpack.c.l.b16 %v220
    %v733 = vunpack.c.l.b16 %v221
    %v734 = vunpack.c.l.b16 %v222
    %v735 = vunpack.c.l.b16 %v223
    %v736 = vunpack.c.l.b16 %v224
    %v737 = vunpack.c.l.b16 %v225
    %v738 = vunpack.c.l.b16 %v226
    %v739 = vunpack.c.l.b16 %v227
    %v740 = vunpack.c.l.b16 %v228
    %v741 = vunpack.c.l.b16 %v229
    %v742 = vunpack.c.l.b16 %v230
    %v743 = vunpack.c.l.b16 %v231
    %v744 = vunpack.c.l.b16 %v232
    %v745 = vunpack.c.l.b16 %v233
    %v746 = vunpack.c.l.b16 %v234
    %v747 = vunpack.c.l.b16 %v235
    %v748 = vunpack.c.l.b16 %v236
    %v749 = vunpack.c.l.b16 %v237
    %v750 = vunpack.c.l.b16 %v238
    %v751 = vunpack.c.l.b16 %v239
    %v752 = vunpack.c.l.b16 %v240
    %v753 = vunpack.c.l.b16 %v241
    %v754 = vunpack.c.l.b16 %v242
    %v755 = vunpack.c.l.b16 %v243
    %v756 = vunpack.c.l.b16 %v244
    %v757 = vunpack.c.l.b16 %v245
    %v758 = vunpack.c.l.b16 %v246
    %v759 = vunpack.c.l.b16 %v247
    %v760 = vunpack.c.l.b16 %v248
    %v761 = vunpack.c.l.b16 %v249
    %v762 = vunpack.c.l.b16 %v250
    %v763 = vunpack.c.l.b16 %v251
    %v764 = vunpack.c.l.b16 %v252
    %v765 = vunpack.c.l.b16 %v253
    %v766 = vunpack.c.l.b16 %v254
    %v767 = vunpack.c.l.b16 %v255
    %v768 = vunpack.c.l.b16 %v256
    %v769 = vunpack.c.l.b16 %v257
    %v770 = vunpack.c.l.b16 %v258
    %v771 = vunpack.c.l.b16 %v259
    %v772 = vunpack.c.l.b16 %v260
    %v773 = vunpack.c.l.b16 %v261
    %v774 = vunpack.c.l.b16 %v262
    %v775 = vunpack.c.l.b16 %v263
    %v776 = vunpack.c.l.b16 %v264
    %v777 = vunpack.c.l.b16 %v265
    %v778 = vunpack.c.l.b16 %v266
    %v779 = vunpack.c.l.b16 %v267
    %v780 = vunpack.c.l.b16 %v268
    %v781 = vunpack.c.l.b16 %v269
    %v782 = vunpack.c.l.b16 %v270
    %v783 = vunpack.c.l.b16 %v271
    %v784 = vunpack.c.l.b16 %v272
    %v785 = vpack.c.b16 %v530, %v529
    %v786 = vpack.c.b16 %v532, %v531
    %v787 = vpack.c.b16 %v534, %v533
    %v788 = vpack.c.b16 %v536, %v535
    %v789 = vpack.c.b16 %v538, %v537
    %v790 = vpack.c.b16 %v540, %v539
    %v791 = vpack.c.b16 %v542, %v541
    %v792 = vpack.c.b16 %v544, %v543
    %v793 = vpack.c.b16 %v546, %v545
    %v794 = vpack.c.b16 %v548, %v547
    %v795 = vpack.c.b16 %v550, %v549
    %v796 = vpack.c.b16 %v552, %v551
    %v797 = vpack.c.b16 %v554, %v553
    %v798 = vpack.c.b16 %v556, %v555
    %v799 = vpack.c.b16 %v558, %v557
    %v800 = vpack.c.b16 %v560, %v559
    %v801 = vpack.c.b16 %v562, %v561
    %v802 = vpack.c.b16 %v564, %v563
    %v803 = vpack.c.b16 %v566, %v565
    %v804 = vpack.c.b16 %v568, %v567
    %v805 = vpack.c.b16 %v570, %v569
    %v806 = vpack.c.b16 %v572, %v571
    %v807 = vpack.c.b16 %v574, %v573
    %v808 = vpack.c.b16 %v576, %v575
    %v809 = vpack.c.b16 %v578, %v577
    %v810 = vpack.c.b16 %v580, %v579
    %v811 = vpack.c.b16 %v582, %v581
    %v812 = vpack.c.b16 %v584, %v583
    %v813 = vpack.c.b16 %v586, %v585
    %v814 = vpack.c.b16 %v588, %v587
    %v815 = vpack.c.b16 %v590, %v589
    %v816 = vpack.c.b16 %v592, %v591
    %v817 = vpack.c.b16 %v594, %v593
    %v818 = vpack.c.b16 %v596, %v595
    %v819 = vpack.c.b16 %v598, %v597
    %v820 = vpack.c.b16 %v600, %v599
    %v821 = vpack.c.b16 %v602, %v601
    %v822 = vpack.c.b16 %v604, %v603
    %v823 = vpack.c.b16 %v606, %v605
    %v824 = vpack.c.b16 %v608, %v607
    %v825 = vpack.c.b16 %v610, %v609
    %v826 = vpack.c.b16 %v612, %v611
    %v827 = vpack.c.b16 %v614, %v613
    %v828 = vpack.c.b16 %v616, %v615
    %v829 = vpack.c.b16 %v618, %v617
    %v830 = vpack.c.b16 %v620, %v619
    %v831 = vpack.c.b16 %v622, %v621
    %v832 = vpack.c.b16 %v624, %v623
    %v833 = vpack.c.b16 %v626, %v625
    %v834 = vpack.c.b16 %v628, %v627
    %v835 = vpack.c.b16 %v630, %v629
    %v836 = vpack.c.b16 %v632, %v631
    %v837 = vpack.c.b16 %v634, %v633
    %v838 = vpack.c.b16 %v636, %v635
    %v839 = vpack.c.b16 %v638, %v637
    %v840 = vpack.c.b16 %v640, %v639
    %v841 = vpack.c.b16 %v642, %v641
    %v842 = vpack.c.b16 %v644, %v643
    %v843 = vpack.c.b16 %v646, %v645
    %v844 = vpack.c.b16 %v648, %v647
    %v845 = vpack.c.b16 %v650, %v649
    %v846 = vpack.c.b16 %v652, %v651
    %v847 = vpack.c.b16 %v654, %v653
    %v848 = vpack.c.b16 %v656, %v655
    %v849 = vpack.c.b16 %v658, %v657
    %v850 = vpack.c.b16 %v660, %v659
    %v851 = vpack.c.b16 %v662, %v661
    %v852 = vpack.c.b16 %v664, %v663
    %v853 = vpack.c.b16 %v666, %v665
    %v854 = vpack.c.b16 %v668, %v667
    %v855 = vpack.c.b16 %v670, %v669
    %v856 = vpack.c.b16 %v672, %v671
    %v857 = vpack.c.b16 %v674, %v673
    %v858 = vpack.c.b16 %v676, %v675
    %v859 = vpack.c.b16 %v678, %v677
    %v860 = vpack.c.b16 %v680, %v679
    %v861 = vpack.c.b16 %v682, %v681
    %v862 = vpack.c.b16 %v684, %v683
    %v863 = vpack.c.b16 %v686, %v685
    %v864 = vpack.c.b16 %v688, %v687
    %v865 = vpack.c.b16 %v690, %v689
    %v866 = vpack.c.b16 %v692, %v691
    %v867 = vpack.c.b16 %v694, %v693
    %v868 = vpack.c.b16 %v696, %v695
    %v869 = vpack.c.b16 %v698, %v697
    %v870 = vpack.c.b16 %v700, %v699
    %v871 = vpack.c.b16 %v702, %v701
    %v872 = vpack.c.b16 %v704, %v703
    %v873 = vpack.c.b16 %v706, %v705
    %v874 = vpack.c.b16 %v708, %v707
    %v875 = vpack.c.b16 %v710, %v709
    %v876 = vpack.c.b16 %v712, %v711
    %v877 = vpack.c.b16 %v714, %v713
    %v878 = vpack.c.b16 %v716, %v715
    %v879 = vpack.c.b16 %v718, %v717
    %v880 = vpack.c.b16 %v720, %v719
    %v881 = vpack.c.b16 %v722, %v721
    %v882 = vpack.c.b16 %v724, %v723
    %v883 = vpack.c.b16 %v726, %v725
    %v884 = vpack.c.b16 %v728, %v727
    %v885 = vpack.c.b16 %v730, %v729
    %v886 = vpack.c.b16 %v732, %v731
    %v887 = vpack.c.b16 %v734, %v733
    %v888 = vpack.c.b16 %v736, %v735
    %v889 = vpack.c.b16 %v738, %v737
    %v890 = vpack.c.b16 %v740, %v739
    %v891 = vpack.c.b16 %v742, %v741
    %v892 = vpack.c.b16 %v744, %v743
    %v893 = vpack.c.b16 %v746, %v745
    %v894 = vpack.c.b16 %v748, %v747
    %v895 = vpack.c.b16 %v750, %v749
    %v896 = vpack.c.b16 %v752, %v751
    %v897 = vpack.c.b16 %v754, %v753
    %v898 = vpack.c.b16 %v756, %v755
    %v899 = vpack.c.b16 %v758, %v757
    %v900 = vpack.c.b16 %v760, %v759
    %v901 = vpack.c.b16 %v762, %v761
    %v902 = vpack.c.b16 %v764, %v763
    %v903 = vpack.c.b16 %v766, %v765
    %v904 = vpack.c.b16 %v768, %v767
    %v905 = vpack.c.b16 %v770, %v769
    %v906 = vpack.c.b16 %v772, %v771
    %v907 = vpack.c.b16 %v774, %v773
    %v908 = vpack.c.b16 %v776, %v775
    %v909 = vpack.c.b16 %v778, %v777
    %v910 = vpack.c.b16 %v780, %v779
    %v911 = vpack.c.b16 %v782, %v781
    %v912 = vpack.c.b16 %v784, %v783
    %vm913 = vcmask 261120
    %v915 = vsel %vm913, %v16, 0
    %v918 = vsel %vm913, %v785, 0
    %v921 = vsel %vm913, %v786, 0
    %v924 = vsel %vm913, %v787, 0
    %v927 = vsel %vm913, %v788, 0
    %v930 = vsel %vm913, %v789, 0
    %v933 = vsel %vm913, %v790, 0
    %v936 = vsel %vm913, %v791, 0
    %v939 = vsel %vm913, %v792, 0
    %v942 = vsel %vm913, %v793, 0
    %v945 = vsel %vm913, %v794, 0
    %v948 = vsel %vm913, %v795, 0
    %v951 = vsel %vm913, %v796, 0
    %v954 = vsel %vm913, %v797, 0
    %v957 = vsel %vm913, %v798, 0
    %v960 = vsel %vm913, %v799, 0
    %v963 = vsel %vm913, %v800, 0
    %v966 = vsel %vm913, %v801, 0
    %v969 = vsel %vm913, %v802, 0
    %v972 = vsel %vm913, %v803, 0
    %v975 = vsel %vm913, %v804, 0
    %v978 = vsel %vm913, %v805, 0
    %v981 = vsel %vm913, %v806, 0
    %v984 = vsel %vm913, %v807, 0
    %v987 = vsel %vm913, %v808, 0
    %v990 = vsel %vm913, %v809, 0
    %v993 = vsel %vm913, %v810, 0
    %v996 = vsel %vm913, %v811, 0
    %v999 = vsel %vm913, %v812, 0
    %v1002 = vsel %vm913, %v813, 0
    %v1005 = vsel %vm913, %v814, 0
    %v1008 = vsel %vm913, %v815, 0
    %v1011 = vsel %vm913, %v816, 0
    %v1014 = vsel %vm913, %v817, 0
    %v1017 = vsel %vm913, %v818, 0
    %v1020 = vsel %vm913, %v819, 0
    %v1023 = vsel %vm913, %v820, 0
    %v1026 = vsel %vm913, %v821, 0
    %v1029 = vsel %vm913, %v822, 0
    %v1032 = vsel %vm913, %v823, 0
    %v1035 = vsel %vm913, %v824, 0
    %v1038 = vsel %vm913, %v825, 0
    %v1041 = vsel %vm913, %v826, 0
    %v1044 = vsel %vm913, %v827, 0
    %v1047 = vsel %vm913, %v828, 0
    %v1050 = vsel %vm913, %v829, 0
    %v1053 = vsel %vm913, %v830, 0
    %v1056 = vsel %vm913, %v831, 0
    %v1059 = vsel %vm913, %v832, 0
    %v1062 = vsel %vm913, %v833, 0
    %v1065 = vsel %vm913, %v834, 0
    %v1068 = vsel %vm913, %v835, 0
    %v1071 = vsel %vm913, %v836, 0
    %v1074 = vsel %vm913, %v837, 0
    %v1077 = vsel %vm913, %v838, 0
    %v1080 = vsel %vm913, %v839, 0
    %v1083 = vsel %vm913, %v840, 0
    %v1086 = vsel %vm913, %v841, 0
    %v1089 = vsel %vm913, %v842, 0
    %v1092 = vsel %vm913, %v843, 0
    %v1095 = vsel %vm913, %v844, 0
    %v1098 = vsel %vm913, %v845, 0
    %v1101 = vsel %vm913, %v846, 0
    %v1104 = vsel %vm913, %v847, 0
    %v1107 = vsel %vm913, %v848, 0
    %v1110 = vsel %vm913, %v849, 0
    %v1113 = vsel %vm913, %v850, 0
    %v1116 = vsel %vm913, %v851, 0
    %v1119 = vsel %vm913, %v852, 0
    %v1122 = vsel %vm913, %v853, 0
    %v1125 = vsel %vm913, %v854, 0
    %v1128 = vsel %vm913, %v855, 0
    %v1131 = vsel %vm913, %v856, 0
    %v1134 = vsel %vm913, %v857, 0
    %v1137 = vsel %vm913, %v858, 0
    %v1140 = vsel %vm913, %v859, 0
    %v1143 = vsel %vm913, %v860, 0
    %v1146 = vsel %vm913, %v861, 0
    %v1149 = vsel %vm913, %v862, 0
    %v1152 = vsel %vm913, %v863, 0
    %v1155 = vsel %vm913, %v864, 0
    %v1158 = vsel %vm913, %v865, 0
    %v1161 = vsel %vm913, %v866, 0
    %v1164 = vsel %vm913, %v867, 0
    %v1167 = vsel %vm913, %v868, 0
    %v1170 = vsel %vm913, %v869, 0
    %v1173 = vsel %vm913, %v870, 0
    %v1176 = vsel %vm913, %v871, 0
    %v1179 = vsel %vm913, %v872, 0
    %v1182 = vsel %vm913, %v873, 0
    %v1185 = vsel %vm913, %v874, 0
    %v1188 = vsel %vm913, %v875, 0
    %v1191 = vsel %vm913, %v876, 0
    %v1194 = vsel %vm913, %v877, 0
    %v1197 = vsel %vm913, %v878, 0
    %v1200 = vsel %vm913, %v879, 0
    %v1203 = vsel %vm913, %v880, 0
    %v1206 = vsel %vm913, %v881, 0
    %v1209 = vsel %vm913, %v882, 0
    %v1212 = vsel %vm913, %v883, 0
    %v1215 = vsel %vm913, %v884, 0
    %v1218 = vsel %vm913, %v885, 0
    %v1221 = vsel %vm913, %v886, 0
    %v1224 = vsel %vm913, %v887, 0
    %v1227 = vsel %vm913, %v888, 0
    %v1230 = vsel %vm913, %v889, 0
    %v1233 = vsel %vm913, %v890, 0
    %v1236 = vsel %vm913, %v891, 0
    %v1239 = vsel %vm913, %v892, 0
    %v1242 = vsel %vm913, %v893, 0
    %v1245 = vsel %vm913, %v894, 0
    %v1248 = vsel %vm913, %v895, 0
    %v1251 = vsel %vm913, %v896, 0
    %v1254 = vsel %vm913, %v897, 0
    %v1257 = vsel %vm913, %v898, 0
    %v1260 = vsel %vm913, %v899, 0
    %v1263 = vsel %vm913, %v900, 0
    %v1266 = vsel %vm913, %v901, 0
    %v1269 = vsel %vm913, %v902, 0
    %v1272 = vsel %vm913, %v903, 0
    %v1275 = vsel %vm913, %v904, 0
    %v1278 = vsel %vm913, %v905, 0
    %v1281 = vsel %vm913, %v906, 0
    %v1284 = vsel %vm913, %v907, 0
    %v1287 = vsel %vm913, %v908, 0
    %v1290 = vsel %vm913, %v909, 0
    %v1293 = vsel %vm913, %v910, 0
    %v1296 = vsel %vm913, %v911, 0
    %v1299 = vsel %vm913, %v912, 0
    %1301 = vmatprep.subr.bf16.mxu0 0
    %1302 = vmatpush1.bf16.xpose.msra.mxu0 %v939
    %1303 = vmatprep.subr.bf16.mxu0 0
    %1304 = vmatpush1.bf16.xpose.msra.mxu0 %v936
    %1305 = vmatprep.subr.bf16.mxu0 0
    %1306 = vmatpush1.bf16.xpose.msra.mxu0 %v933
    %1307 = vmatprep.subr.bf16.mxu0 0
    %1308 = vmatpush1.bf16.xpose.msra.mxu0 %v930
    %1309 = vmatprep.subr.bf16.mxu0 0
    %1310 = vmatpush1.bf16.xpose.msra.mxu0 %v927
    %1311 = vmatprep.subr.bf16.mxu0 0
    %1312 = vmatpush1.bf16.xpose.msra.mxu0 %v924
    %1313 = vmatprep.subr.bf16.mxu0 0
    %1314 = vmatpush1.bf16.xpose.msra.mxu0 %v921
    %1315 = vmatprep.subr.bf16.mxu0 0
    %1316 = vmatpush1.bf16.xpose.msra.mxu0 %v918
    %1317 = vmatprep.subr.bf16.mxu0 0
    %1318 = vmatpush2.bf16.xpose.msra.mxu0 %v963
    %1319 = vmatprep.subr.bf16.mxu0 0
    %1320 = vmatpush2.bf16.xpose.msra.mxu0 %v960
    %1321 = vmatprep.subr.bf16.mxu0 0
    %1322 = vmatpush2.bf16.xpose.msra.mxu0 %v957
    %1323 = vmatprep.subr.bf16.mxu0 0
    %1324 = vmatpush2.bf16.xpose.msra.mxu0 %v954
    %1325 = vmatprep.subr.bf16.mxu0 0
    %1326 = vmatpush2.bf16.xpose.msra.mxu0 %v951
    %1327 = vmatprep.subr.bf16.mxu0 0
    %1328 = vmatpush2.bf16.xpose.msra.mxu0 %v948
    %1329 = vmatprep.subr.bf16.mxu0 0
    %1330 = vmatpush2.bf16.xpose.msra.mxu0 %v945
    %1331 = vmatprep.subr.bf16.mxu0 0
    %1332 = vmatpush2.bf16.xpose.msra.mxu0 %v942
    %1333 = vmatprep.mubr.bf16.mxu0 0
    %1334 = vmatmul.mubr.bf16.gmra.mxu0 %v915
    %v1335 = vpop.f32.mrf.mxu0
    %v1336 = vadd.f32 0.0, %v1335
    %v1337 = vpop.f32.mrf.mxu0
    %v1338 = vadd.f32 0.0, %v1337
    %v1339 = vpop.f32.mrf.mxu0
    %v1340 = vpop.f32.mrf.mxu0
    %1341 = vdwg.mxu0
    %1342 = vmatprep.subr.bf16.mxu0 0
    %1343 = vmatpush1.bf16.xpose.msra.mxu0 %v987
    %1344 = vmatprep.subr.bf16.mxu0 0
    %1345 = vmatpush1.bf16.xpose.msra.mxu0 %v984
    %1346 = vmatprep.subr.bf16.mxu0 0
    %1347 = vmatpush1.bf16.xpose.msra.mxu0 %v981
    %1348 = vmatprep.subr.bf16.mxu0 0
    %1349 = vmatpush1.bf16.xpose.msra.mxu0 %v978
    %1350 = vmatprep.subr.bf16.mxu0 0
    %1351 = vmatpush1.bf16.xpose.msra.mxu0 %v975
    %1352 = vmatprep.subr.bf16.mxu0 0
    %1353 = vmatpush1.bf16.xpose.msra.mxu0 %v972
    %1354 = vmatprep.subr.bf16.mxu0 0
    %1355 = vmatpush1.bf16.xpose.msra.mxu0 %v969
    %1356 = vmatprep.subr.bf16.mxu0 0
    %1357 = vmatpush1.bf16.xpose.msra.mxu0 %v966
    %1358 = vmatprep.subr.bf16.mxu0 0
    %1359 = vmatpush2.bf16.xpose.msra.mxu0 %v1011
    %1360 = vmatprep.subr.bf16.mxu0 0
    %1361 = vmatpush2.bf16.xpose.msra.mxu0 %v1008
    %1362 = vmatprep.subr.bf16.mxu0 0
    %1363 = vmatpush2.bf16.xpose.msra.mxu0 %v1005
    %1364 = vmatprep.subr.bf16.mxu0 0
    %1365 = vmatpush2.bf16.xpose.msra.mxu0 %v1002
    %1366 = vmatprep.subr.bf16.mxu0 0
    %1367 = vmatpush2.bf16.xpose.msra.mxu0 %v999
    %1368 = vmatprep.subr.bf16.mxu0 0
    %1369 = vmatpush2.bf16.xpose.msra.mxu0 %v996
    %1370 = vmatprep.subr.bf16.mxu0 0
    %1371 = vmatpush2.bf16.xpose.msra.mxu0 %v993
    %1372 = vmatprep.subr.bf16.mxu0 0
    %1373 = vmatpush2.bf16.xpose.msra.mxu0 %v990
    %1374 = vmatprep.mubr.bf16.mxu0 0
    %1375 = vmatmul.mubr.bf16.gmra.mxu0 %v915
    %v1376 = vpop.f32.mrf.mxu0
    %v1377 = vadd.f32 0.0, %v1376
    %v1378 = vpop.f32.mrf.mxu0
    %v1379 = vadd.f32 0.0, %v1378
    %v1380 = vpop.f32.mrf.mxu0
    %v1381 = vpop.f32.mrf.mxu0
    %1382 = vdwg.mxu0
    %1383 = vmatprep.subr.bf16.mxu0 0
    %1384 = vmatpush1.bf16.xpose.msra.mxu0 %v1035
    %1385 = vmatprep.subr.bf16.mxu0 0
    %1386 = vmatpush1.bf16.xpose.msra.mxu0 %v1032
    %1387 = vmatprep.subr.bf16.mxu0 0
    %1388 = vmatpush1.bf16.xpose.msra.mxu0 %v1029
    %1389 = vmatprep.subr.bf16.mxu0 0
    %1390 = vmatpush1.bf16.xpose.msra.mxu0 %v1026
    %1391 = vmatprep.subr.bf16.mxu0 0
    %1392 = vmatpush1.bf16.xpose.msra.mxu0 %v1023
    %1393 = vmatprep.subr.bf16.mxu0 0
    %1394 = vmatpush1.bf16.xpose.msra.mxu0 %v1020
    %1395 = vmatprep.subr.bf16.mxu0 0
    %1396 = vmatpush1.bf16.xpose.msra.mxu0 %v1017
    %1397 = vmatprep.subr.bf16.mxu0 0
    %1398 = vmatpush1.bf16.xpose.msra.mxu0 %v1014
    %1399 = vmatprep.subr.bf16.mxu0 0
    %1400 = vmatpush2.bf16.xpose.msra.mxu0 %v1059
    %1401 = vmatprep.subr.bf16.mxu0 0
    %1402 = vmatpush2.bf16.xpose.msra.mxu0 %v1056
    %1403 = vmatprep.subr.bf16.mxu0 0
    %1404 = vmatpush2.bf16.xpose.msra.mxu0 %v1053
    %1405 = vmatprep.subr.bf16.mxu0 0
    %1406 = vmatpush2.bf16.xpose.msra.mxu0 %v1050
    %1407 = vmatprep.subr.bf16.mxu0 0
    %1408 = vmatpush2.bf16.xpose.msra.mxu0 %v1047
    %1409 = vmatprep.subr.bf16.mxu0 0
    %1410 = vmatpush2.bf16.xpose.msra.mxu0 %v1044
    %1411 = vmatprep.subr.bf16.mxu0 0
    %1412 = vmatpush2.bf16.xpose.msra.mxu0 %v1041
    %1413 = vmatprep.subr.bf16.mxu0 0
    %1414 = vmatpush2.bf16.xpose.msra.mxu0 %v1038
    %1415 = vmatprep.mubr.bf16.mxu0 0
    %1416 = vmatmul.mubr.bf16.gmra.mxu0 %v915
    %v1417 = vpop.f32.mrf.mxu0
    %v1418 = vadd.f32 0.0, %v1417
    %v1419 = vpop.f32.mrf.mxu0
    %v1420 = vadd.f32 0.0, %v1419
    %v1421 = vpop.f32.mrf.mxu0
    %v1422 = vpop.f32.mrf.mxu0
    %1423 = vdwg.mxu0
    %1424 = vmatprep.subr.bf16.mxu0 0
    %1425 = vmatpush1.bf16.xpose.msra.mxu0 %v1083
    %1426 = vmatprep.subr.bf16.mxu0 0
    %1427 = vmatpush1.bf16.xpose.msra.mxu0 %v1080
    %1428 = vmatprep.subr.bf16.mxu0 0
    %1429 = vmatpush1.bf16.xpose.msra.mxu0 %v1077
    %1430 = vmatprep.subr.bf16.mxu0 0
    %1431 = vmatpush1.bf16.xpose.msra.mxu0 %v1074
    %1432 = vmatprep.subr.bf16.mxu0 0
    %1433 = vmatpush1.bf16.xpose.msra.mxu0 %v1071
    %1434 = vmatprep.subr.bf16.mxu0 0
    %1435 = vmatpush1.bf16.xpose.msra.mxu0 %v1068
    %1436 = vmatprep.subr.bf16.mxu0 0
    %1437 = vmatpush1.bf16.xpose.msra.mxu0 %v1065
    %1438 = vmatprep.subr.bf16.mxu0 0
    %1439 = vmatpush1.bf16.xpose.msra.mxu0 %v1062
    %1440 = vmatprep.subr.bf16.mxu0 0
    %1441 = vmatpush2.bf16.xpose.msra.mxu0 %v1107
    %1442 = vmatprep.subr.bf16.mxu0 0
    %1443 = vmatpush2.bf16.xpose.msra.mxu0 %v1104
    %1444 = vmatprep.subr.bf16.mxu0 0
    %1445 = vmatpush2.bf16.xpose.msra.mxu0 %v1101
    %1446 = vmatprep.subr.bf16.mxu0 0
    %1447 = vmatpush2.bf16.xpose.msra.mxu0 %v1098
    %1448 = vmatprep.subr.bf16.mxu0 0
    %1449 = vmatpush2.bf16.xpose.msra.mxu0 %v1095
    %1450 = vmatprep.subr.bf16.mxu0 0
    %1451 = vmatpush2.bf16.xpose.msra.mxu0 %v1092
    %1452 = vmatprep.subr.bf16.mxu0 0
    %1453 = vmatpush2.bf16.xpose.msra.mxu0 %v1089
    %1454 = vmatprep.subr.bf16.mxu0 0
    %1455 = vmatpush2.bf16.xpose.msra.mxu0 %v1086
    %1456 = vmatprep.mubr.bf16.mxu0 0
    %1457 = vmatmul.mubr.bf16.gmra.mxu0 %v915
    %v1458 = vpop.f32.mrf.mxu0
    %v1459 = vadd.f32 0.0, %v1458
    %v1460 = vpop.f32.mrf.mxu0
    %v1461 = vadd.f32 0.0, %v1460
    %v1462 = vpop.f32.mrf.mxu0
    %v1463 = vpop.f32.mrf.mxu0
    %1464 = vdwg.mxu0
    %1465 = vmatprep.subr.bf16.mxu0 0
    %1466 = vmatpush1.bf16.xpose.msra.mxu0 %v1131
    %1467 = vmatprep.subr.bf16.mxu0 0
    %1468 = vmatpush1.bf16.xpose.msra.mxu0 %v1128
    %1469 = vmatprep.subr.bf16.mxu0 0
    %1470 = vmatpush1.bf16.xpose.msra.mxu0 %v1125
    %1471 = vmatprep.subr.bf16.mxu0 0
    %1472 = vmatpush1.bf16.xpose.msra.mxu0 %v1122
    %1473 = vmatprep.subr.bf16.mxu0 0
    %1474 = vmatpush1.bf16.xpose.msra.mxu0 %v1119
    %1475 = vmatprep.subr.bf16.mxu0 0
    %1476 = vmatpush1.bf16.xpose.msra.mxu0 %v1116
    %1477 = vmatprep.subr.bf16.mxu0 0
    %1478 = vmatpush1.bf16.xpose.msra.mxu0 %v1113
    %1479 = vmatprep.subr.bf16.mxu0 0
    %1480 = vmatpush1.bf16.xpose.msra.mxu0 %v1110
    %1481 = vmatprep.subr.bf16.mxu0 0
    %1482 = vmatpush2.bf16.xpose.msra.mxu0 %v1155
    %1483 = vmatprep.subr.bf16.mxu0 0
    %1484 = vmatpush2.bf16.xpose.msra.mxu0 %v1152
    %1485 = vmatprep.subr.bf16.mxu0 0
    %1486 = vmatpush2.bf16.xpose.msra.mxu0 %v1149
    %1487 = vmatprep.subr.bf16.mxu0 0
    %1488 = vmatpush2.bf16.xpose.msra.mxu0 %v1146
    %1489 = vmatprep.subr.bf16.mxu0 0
    %1490 = vmatpush2.bf16.xpose.msra.mxu0 %v1143
    %1491 = vmatprep.subr.bf16.mxu0 0
    %1492 = vmatpush2.bf16.xpose.msra.mxu0 %v1140
    %1493 = vmatprep.subr.bf16.mxu0 0
    %1494 = vmatpush2.bf16.xpose.msra.mxu0 %v1137
    %1495 = vmatprep.subr.bf16.mxu0 0
    %1496 = vmatpush2.bf16.xpose.msra.mxu0 %v1134
    %1497 = vmatprep.mubr.bf16.mxu0 0
    %1498 = vmatmul.mubr.bf16.gmra.mxu0 %v915
    %v1499 = vpop.f32.mrf.mxu0
    %v1500 = vadd.f32 0.0, %v1499
    %v1501 = vpop.f32.mrf.mxu0
    %v1502 = vadd.f32 0.0, %v1501
    %v1503 = vpop.f32.mrf.mxu0
    %v1504 = vpop.f32.mrf.mxu0
    %1505 = vdwg.mxu0
    %1506 = vmatprep.subr.bf16.mxu0 0
    %1507 = vmatpush1.bf16.xpose.msra.mxu0 %v1179
    %1508 = vmatprep.subr.bf16.mxu0 0
    %1509 = vmatpush1.bf16.xpose.msra.mxu0 %v1176
    %1510 = vmatprep.subr.bf16.mxu0 0
    %1511 = vmatpush1.bf16.xpose.msra.mxu0 %v1173
    %1512 = vmatprep.subr.bf16.mxu0 0
    %1513 = vmatpush1.bf16.xpose.msra.mxu0 %v1170
    %1514 = vmatprep.subr.bf16.mxu0 0
    %1515 = vmatpush1.bf16.xpose.msra.mxu0 %v1167
    %1516 = vmatprep.subr.bf16.mxu0 0
    %1517 = vmatpush1.bf16.xpose.msra.mxu0 %v1164
    %1518 = vmatprep.subr.bf16.mxu0 0
    %1519 = vmatpush1.bf16.xpose.msra.mxu0 %v1161
    %1520 = vmatprep.subr.bf16.mxu0 0
    %1521 = vmatpush1.bf16.xpose.msra.mxu0 %v1158
    %1522 = vmatprep.subr.bf16.mxu0 0
    %1523 = vmatpush2.bf16.xpose.msra.mxu0 %v1203
    %1524 = vmatprep.subr.bf16.mxu0 0
    %1525 = vmatpush2.bf16.xpose.msra.mxu0 %v1200
    %1526 = vmatprep.subr.bf16.mxu0 0
    %1527 = vmatpush2.bf16.xpose.msra.mxu0 %v1197
    %1528 = vmatprep.subr.bf16.mxu0 0
    %1529 = vmatpush2.bf16.xpose.msra.mxu0 %v1194
    %1530 = vmatprep.subr.bf16.mxu0 0
    %1531 = vmatpush2.bf16.xpose.msra.mxu0 %v1191
    %1532 = vmatprep.subr.bf16.mxu0 0
    %1533 = vmatpush2.bf16.xpose.msra.mxu0 %v1188
    %1534 = vmatprep.subr.bf16.mxu0 0
    %1535 = vmatpush2.bf16.xpose.msra.mxu0 %v1185
    %1536 = vmatprep.subr.bf16.mxu0 0
    %1537 = vmatpush2.bf16.xpose.msra.mxu0 %v1182
    %1538 = vmatprep.mubr.bf16.mxu0 0
    %1539 = vmatmul.mubr.bf16.gmra.mxu0 %v915
    %v1540 = vpop.f32.mrf.mxu0
    %v1541 = vadd.f32 0.0, %v1540
    %v1542 = vpop.f32.mrf.mxu0
    %v1543 = vadd.f32 0.0, %v1542
    %v1544 = vpop.f32.mrf.mxu0
    %v1545 = vpop.f32.mrf.mxu0
    %1546 = vdwg.mxu0
    %1547 = vmatprep.subr.bf16.mxu0 0
    %1548 = vmatpush1.bf16.xpose.msra.mxu0 %v1227
    %1549 = vmatprep.subr.bf16.mxu0 0
    %1550 = vmatpush1.bf16.xpose.msra.mxu0 %v1224
    %1551 = vmatprep.subr.bf16.mxu0 0
    %1552 = vmatpush1.bf16.xpose.msra.mxu0 %v1221
    %1553 = vmatprep.subr.bf16.mxu0 0
    %1554 = vmatpush1.bf16.xpose.msra.mxu0 %v1218
    %1555 = vmatprep.subr.bf16.mxu0 0
    %1556 = vmatpush1.bf16.xpose.msra.mxu0 %v1215
    %1557 = vmatprep.subr.bf16.mxu0 0
    %1558 = vmatpush1.bf16.xpose.msra.mxu0 %v1212
    %1559 = vmatprep.subr.bf16.mxu0 0
    %1560 = vmatpush1.bf16.xpose.msra.mxu0 %v1209
    %1561 = vmatprep.subr.bf16.mxu0 0
    %1562 = vmatpush1.bf16.xpose.msra.mxu0 %v1206
    %1563 = vmatprep.subr.bf16.mxu0 0
    %1564 = vmatpush2.bf16.xpose.msra.mxu0 %v1251
    %1565 = vmatprep.subr.bf16.mxu0 0
    %1566 = vmatpush2.bf16.xpose.msra.mxu0 %v1248
    %1567 = vmatprep.subr.bf16.mxu0 0
    %1568 = vmatpush2.bf16.xpose.msra.mxu0 %v1245
    %1569 = vmatprep.subr.bf16.mxu0 0
    %1570 = vmatpush2.bf16.xpose.msra.mxu0 %v1242
    %1571 = vmatprep.subr.bf16.mxu0 0
    %1572 = vmatpush2.bf16.xpose.msra.mxu0 %v1239
    %1573 = vmatprep.subr.bf16.mxu0 0
    %1574 = vmatpush2.bf16.xpose.msra.mxu0 %v1236
    %1575 = vmatprep.subr.bf16.mxu0 0
    %1576 = vmatpush2.bf16.xpose.msra.mxu0 %v1233
    %1577 = vmatprep.subr.bf16.mxu0 0
    %1578 = vmatpush2.bf16.xpose.msra.mxu0 %v1230
    %1579 = vmatprep.mubr.bf16.mxu0 0
    %1580 = vmatmul.mubr.bf16.gmra.mxu0 %v915
    %v1581 = vpop.f32.mrf.mxu0
    %v1582 = vadd.f32 0.0, %v1581
    %v1583 = vpop.f32.mrf.mxu0
    %v1584 = vadd.f32 0.0, %v1583
    %v1585 = vpop.f32.mrf.mxu0
    %v1586 = vpop.f32.mrf.mxu0
    %1587 = vdwg.mxu0
    %1588 = vmatprep.subr.bf16.mxu0 0
    %1589 = vmatpush1.bf16.xpose.msra.mxu0 %v1275
    %1590 = vmatprep.subr.bf16.mxu0 0
    %1591 = vmatpush1.bf16.xpose.msra.mxu0 %v1272
    %1592 = vmatprep.subr.bf16.mxu0 0
    %1593 = vmatpush1.bf16.xpose.msra.mxu0 %v1269
    %1594 = vmatprep.subr.bf16.mxu0 0
    %1595 = vmatpush1.bf16.xpose.msra.mxu0 %v1266
    %1596 = vmatprep.subr.bf16.mxu0 0
    %1597 = vmatpush1.bf16.xpose.msra.mxu0 %v1263
    %1598 = vmatprep.subr.bf16.mxu0 0
    %1599 = vmatpush1.bf16.xpose.msra.mxu0 %v1260
    %1600 = vmatprep.subr.bf16.mxu0 0
    %1601 = vmatpush1.bf16.xpose.msra.mxu0 %v1257
    %1602 = vmatprep.subr.bf16.mxu0 0
    %1603 = vmatpush1.bf16.xpose.msra.mxu0 %v1254
    %1604 = vmatprep.subr.bf16.mxu0 0
    %1605 = vmatpush2.bf16.xpose.msra.mxu0 %v1299
    %1606 = vmatprep.subr.bf16.mxu0 0
    %1607 = vmatpush2.bf16.xpose.msra.mxu0 %v1296
    %1608 = vmatprep.subr.bf16.mxu0 0
    %1609 = vmatpush2.bf16.xpose.msra.mxu0 %v1293
    %1610 = vmatprep.subr.bf16.mxu0 0
    %1611 = vmatpush2.bf16.xpose.msra.mxu0 %v1290
    %1612 = vmatprep.subr.bf16.mxu0 0
    %1613 = vmatpush2.bf16.xpose.msra.mxu0 %v1287
    %1614 = vmatprep.subr.bf16.mxu0 0
    %1615 = vmatpush2.bf16.xpose.msra.mxu0 %v1284
    %1616 = vmatprep.subr.bf16.mxu0 0
    %1617 = vmatpush2.bf16.xpose.msra.mxu0 %v1281
    %1618 = vmatprep.subr.bf16.mxu0 0
    %1619 = vmatpush2.bf16.xpose.msra.mxu0 %v1278
    %1620 = vmatprep.mubr.bf16.mxu0 0
    %1621 = vmatmul.mubr.bf16.gmra.mxu0 %v915
    %v1622 = vpop.f32.mrf.mxu0
    %v1623 = vadd.f32 0.0, %v1622
    %v1624 = vpop.f32.mrf.mxu0
    %v1625 = vadd.f32 0.0, %v1624
    %v1626 = vpop.f32.mrf.mxu0
    %v1627 = vpop.f32.mrf.mxu0
    %1628 = vdwg.mxu0
    %vm1629 = vcmask 1043456
    %v1630 = vsel %vm1629, %v1336, 0.0
    %v1631 = vrot.slane %v1630, 4
    %v1632 = vadd.f32 %v1630, %v1631
    %v1633 = vrot.slane %v1632, 2
    %v1634 = vadd.f32 %v1632, %v1633
    %v1635 = vrot.slane %v1634, 1
    %v1636 = vadd.f32 %v1634, %v1635
    %v1637 = vsel %vm1629, %v1338, 0.0
    %v1638 = vrot.slane %v1637, 4
    %v1639 = vadd.f32 %v1637, %v1638
    %v1640 = vrot.slane %v1639, 2
    %v1641 = vadd.f32 %v1639, %v1640
    %v1642 = vrot.slane %v1641, 1
    %v1643 = vadd.f32 %v1641, %v1642
    %v1644 = vsel %vm1629, %v1377, 0.0
    %v1645 = vrot.slane %v1644, 4
    %v1646 = vadd.f32 %v1644, %v1645
    %v1647 = vrot.slane %v1646, 2
    %v1648 = vadd.f32 %v1646, %v1647
    %v1649 = vrot.slane %v1648, 1
    %v1650 = vadd.f32 %v1648, %v1649
    %v1651 = vsel %vm1629, %v1379, 0.0
    %v1652 = vrot.slane %v1651, 4
    %v1653 = vadd.f32 %v1651, %v1652
    %v1654 = vrot.slane %v1653, 2
    %v1655 = vadd.f32 %v1653, %v1654
    %v1656 = vrot.slane %v1655, 1
    %v1657 = vadd.f32 %v1655, %v1656
    %v1658 = vsel %vm1629, %v1418, 0.0
    %v1659 = vrot.slane %v1658, 4
    %v1660 = vadd.f32 %v1658, %v1659
    %v1661 = vrot.slane %v1660, 2
    %v1662 = vadd.f32 %v1660, %v1661
    %v1663 = vrot.slane %v1662, 1
    %v1664 = vadd.f32 %v1662, %v1663
    %v1665 = vsel %vm1629, %v1420, 0.0
    %v1666 = vrot.slane %v1665, 4
    %v1667 = vadd.f32 %v1665, %v1666
    %v1668 = vrot.slane %v1667, 2
    %v1669 = vadd.f32 %v1667, %v1668
    %v1670 = vrot.slane %v1669, 1
    %v1671 = vadd.f32 %v1669, %v1670
    %v1672 = vsel %vm1629, %v1459, 0.0
    %v1673 = vrot.slane %v1672, 4
    %v1674 = vadd.f32 %v1672, %v1673
    %v1675 = vrot.slane %v1674, 2
    %v1676 = vadd.f32 %v1674, %v1675
    %v1677 = vrot.slane %v1676, 1
    %v1678 = vadd.f32 %v1676, %v1677
    %v1679 = vsel %vm1629, %v1461, 0.0
    %v1680 = vrot.slane %v1679, 4
    %v1681 = vadd.f32 %v1679, %v1680
    %v1682 = vrot.slane %v1681, 2
    %v1683 = vadd.f32 %v1681, %v1682
    %v1684 = vrot.slane %v1683, 1
    %v1685 = vadd.f32 %v1683, %v1684
    %v1686 = vsel %vm1629, %v1500, 0.0
    %v1687 = vrot.slane %v1686, 4
    %v1688 = vadd.f32 %v1686, %v1687
    %v1689 = vrot.slane %v1688, 2
    %v1690 = vadd.f32 %v1688, %v1689
    %v1691 = vrot.slane %v1690, 1
    %v1692 = vadd.f32 %v1690, %v1691
    %v1693 = vsel %vm1629, %v1502, 0.0
    %v1694 = vrot.slane %v1693, 4
    %v1695 = vadd.f32 %v1693, %v1694
    %v1696 = vrot.slane %v1695, 2
    %v1697 = vadd.f32 %v1695, %v1696
    %v1698 = vrot.slane %v1697, 1
    %v1699 = vadd.f32 %v1697, %v1698
    %v1700 = vsel %vm1629, %v1541, 0.0
    %v1701 = vrot.slane %v1700, 4
    %v1702 = vadd.f32 %v1700, %v1701
    %v1703 = vrot.slane %v1702, 2
    %v1704 = vadd.f32 %v1702, %v1703
    %v1705 = vrot.slane %v1704, 1
    %v1706 = vadd.f32 %v1704, %v1705
    %v1707 = vsel %vm1629, %v1543, 0.0
    %v1708 = vrot.slane %v1707, 4
    %v1709 = vadd.f32 %v1707, %v1708
    %v1710 = vrot.slane %v1709, 2
    %v1711 = vadd.f32 %v1709, %v1710
    %v1712 = vrot.slane %v1711, 1
    %v1713 = vadd.f32 %v1711, %v1712
    %v1714 = vsel %vm1629, %v1582, 0.0
    %v1715 = vrot.slane %v1714, 4
    %v1716 = vadd.f32 %v1714, %v1715
    %v1717 = vrot.slane %v1716, 2
    %v1718 = vadd.f32 %v1716, %v1717
    %v1719 = vrot.slane %v1718, 1
    %v1720 = vadd.f32 %v1718, %v1719
    %v1721 = vsel %vm1629, %v1584, 0.0
    %v1722 = vrot.slane %v1721, 4
    %v1723 = vadd.f32 %v1721, %v1722
    %v1724 = vrot.slane %v1723, 2
    %v1725 = vadd.f32 %v1723, %v1724
    %v1726 = vrot.slane %v1725, 1
    %v1727 = vadd.f32 %v1725, %v1726
    %v1728 = vsel %vm1629, %v1623, 0.0
    %v1729 = vrot.slane %v1728, 4
    %v1730 = vadd.f32 %v1728, %v1729
    %v1731 = vrot.slane %v1730, 2
    %v1732 = vadd.f32 %v1730, %v1731
    %v1733 = vrot.slane %v1732, 1
    %v1734 = vadd.f32 %v1732, %v1733
    %v1735 = vsel %vm1629, %v1625, 0.0
    %v1736 = vrot.slane %v1735, 4
    %v1737 = vadd.f32 %v1735, %v1736
    %v1738 = vrot.slane %v1737, 2
    %v1739 = vadd.f32 %v1737, %v1738
    %v1740 = vrot.slane %v1739, 1
    %v1741 = vadd.f32 %v1739, %v1740
    %v1742 = vmul.f32 %v1636, 0.25
    %v1743 = vmul.f32 %v1643, 0.25
    %v1744 = vmul.f32 %v1650, 0.25
    %v1745 = vmul.f32 %v1657, 0.25
    %v1746 = vmul.f32 %v1664, 0.25
    %v1747 = vmul.f32 %v1671, 0.25
    %v1748 = vmul.f32 %v1678, 0.25
    %v1749 = vmul.f32 %v1685, 0.25
    %v1750 = vmul.f32 %v1692, 0.25
    %v1751 = vmul.f32 %v1699, 0.25
    %v1752 = vmul.f32 %v1706, 0.25
    %v1753 = vmul.f32 %v1713, 0.25
    %v1754 = vmul.f32 %v1720, 0.25
    %v1755 = vmul.f32 %v1727, 0.25
    %v1756 = vmul.f32 %v1734, 0.25
    %v1757 = vmul.f32 %v1741, 0.25
    %v1758 = vmul.f32 %v1336, %v1336
    %v1759 = vmul.f32 %v1338, %v1338
    %v1760 = vmul.f32 %v1377, %v1377
    %v1761 = vmul.f32 %v1379, %v1379
    %v1762 = vmul.f32 %v1418, %v1418
    %v1763 = vmul.f32 %v1420, %v1420
    %v1764 = vmul.f32 %v1459, %v1459
    %v1765 = vmul.f32 %v1461, %v1461
    %v1766 = vmul.f32 %v1500, %v1500
    %v1767 = vmul.f32 %v1502, %v1502
    %v1768 = vmul.f32 %v1541, %v1541
    %v1769 = vmul.f32 %v1543, %v1543
    %v1770 = vmul.f32 %v1582, %v1582
    %v1771 = vmul.f32 %v1584, %v1584
    %v1772 = vmul.f32 %v1623, %v1623
    %v1773 = vmul.f32 %v1625, %v1625
    %v1774 = vsel %vm1629, %v1758, 0.0
    %v1775 = vrot.slane %v1774, 4
    %v1776 = vadd.f32 %v1774, %v1775
    %v1777 = vrot.slane %v1776, 2
    %v1778 = vadd.f32 %v1776, %v1777
    %v1779 = vrot.slane %v1778, 1
    %v1780 = vadd.f32 %v1778, %v1779
    %v1781 = vsel %vm1629, %v1759, 0.0
    %v1782 = vrot.slane %v1781, 4
    %v1783 = vadd.f32 %v1781, %v1782
    %v1784 = vrot.slane %v1783, 2
    %v1785 = vadd.f32 %v1783, %v1784
    %v1786 = vrot.slane %v1785, 1
    %v1787 = vadd.f32 %v1785, %v1786
    %v1788 = vsel %vm1629, %v1760, 0.0
    %v1789 = vrot.slane %v1788, 4
    %v1790 = vadd.f32 %v1788, %v1789
    %v1791 = vrot.slane %v1790, 2
    %v1792 = vadd.f32 %v1790, %v1791
    %v1793 = vrot.slane %v1792, 1
    %v1794 = vadd.f32 %v1792, %v1793
    %v1795 = vsel %vm1629, %v1761, 0.0
    %v1796 = vrot.slane %v1795, 4
    %v1797 = vadd.f32 %v1795, %v1796
    %v1798 = vrot.slane %v1797, 2
    %v1799 = vadd.f32 %v1797, %v1798
    %v1800 = vrot.slane %v1799, 1
    %v1801 = vadd.f32 %v1799, %v1800
    %v1802 = vsel %vm1629, %v1762, 0.0
    %v1803 = vrot.slane %v1802, 4
    %v1804 = vadd.f32 %v1802, %v1803
    %v1805 = vrot.slane %v1804, 2
    %v1806 = vadd.f32 %v1804, %v1805
    %v1807 = vrot.slane %v1806, 1
    %v1808 = vadd.f32 %v1806, %v1807
    %v1809 = vsel %vm1629, %v1763, 0.0
    %v1810 = vrot.slane %v1809, 4
    %v1811 = vadd.f32 %v1809, %v1810
    %v1812 = vrot.slane %v1811, 2
    %v1813 = vadd.f32 %v1811, %v1812
    %v1814 = vrot.slane %v1813, 1
    %v1815 = vadd.f32 %v1813, %v1814
    %v1816 = vsel %vm1629, %v1764, 0.0
    %v1817 = vrot.slane %v1816, 4
    %v1818 = vadd.f32 %v1816, %v1817
    %v1819 = vrot.slane %v1818, 2
    %v1820 = vadd.f32 %v1818, %v1819
    %v1821 = vrot.slane %v1820, 1
    %v1822 = vadd.f32 %v1820, %v1821
    %v1823 = vsel %vm1629, %v1765, 0.0
    %v1824 = vrot.slane %v1823, 4
    %v1825 = vadd.f32 %v1823, %v1824
    %v1826 = vrot.slane %v1825, 2
    %v1827 = vadd.f32 %v1825, %v1826
    %v1828 = vrot.slane %v1827, 1
    %v1829 = vadd.f32 %v1827, %v1828
    %v1830 = vsel %vm1629, %v1766, 0.0
    %v1831 = vrot.slane %v1830, 4
    %v1832 = vadd.f32 %v1830, %v1831
    %v1833 = vrot.slane %v1832, 2
    %v1834 = vadd.f32 %v1832, %v1833
    %v1835 = vrot.slane %v1834, 1
    %v1836 = vadd.f32 %v1834, %v1835
    %v1837 = vsel %vm1629, %v1767, 0.0
    %v1838 = vrot.slane %v1837, 4
    %v1839 = vadd.f32 %v1837, %v1838
    %v1840 = vrot.slane %v1839, 2
    %v1841 = vadd.f32 %v1839, %v1840
    %v1842 = vrot.slane %v1841, 1
    %v1843 = vadd.f32 %v1841, %v1842
    %v1844 = vsel %vm1629, %v1768, 0.0
    %v1845 = vrot.slane %v1844, 4
    %v1846 = vadd.f32 %v1844, %v1845
    %v1847 = vrot.slane %v1846, 2
    %v1848 = vadd.f32 %v1846, %v1847
    %v1849 = vrot.slane %v1848, 1
    %v1850 = vadd.f32 %v1848, %v1849
    %v1851 = vsel %vm1629, %v1769, 0.0
    %v1852 = vrot.slane %v1851, 4
    %v1853 = vadd.f32 %v1851, %v1852
    %v1854 = vrot.slane %v1853, 2
    %v1855 = vadd.f32 %v1853, %v1854
    %v1856 = vrot.slane %v1855, 1
    %v1857 = vadd.f32 %v1855, %v1856
    %v1858 = vsel %vm1629, %v1770, 0.0
    %v1859 = vrot.slane %v1858, 4
    %v1860 = vadd.f32 %v1858, %v1859
    %v1861 = vrot.slane %v1860, 2
    %v1862 = vadd.f32 %v1860, %v1861
    %v1863 = vrot.slane %v1862, 1
    %v1864 = vadd.f32 %v1862, %v1863
    %v1865 = vsel %vm1629, %v1771, 0.0
    %v1866 = vrot.slane %v1865, 4
    %v1867 = vadd.f32 %v1865, %v1866
    %v1868 = vrot.slane %v1867, 2
    %v1869 = vadd.f32 %v1867, %v1868
    %v1870 = vrot.slane %v1869, 1
    %v1871 = vadd.f32 %v1869, %v1870
    %v1872 = vsel %vm1629, %v1772, 0.0
    %v1873 = vrot.slane %v1872, 4
    %v1874 = vadd.f32 %v1872, %v1873
    %v1875 = vrot.slane %v1874, 2
    %v1876 = vadd.f32 %v1874, %v1875
    %v1877 = vrot.slane %v1876, 1
    %v1878 = vadd.f32 %v1876, %v1877
    %v1879 = vsel %vm1629, %v1773, 0.0
    %v1880 = vrot.slane %v1879, 4
    %v1881 = vadd.f32 %v1879, %v1880
    %v1882 = vrot.slane %v1881, 2
    %v1883 = vadd.f32 %v1881, %v1882
    %v1884 = vrot.slane %v1883, 1
    %v1885 = vadd.f32 %v1883, %v1884
    %v1886 = vmul.f32 %v1780, 0.25
    %v1887 = vmul.f32 %v1787, 0.25
    %v1888 = vmul.f32 %v1794, 0.25
    %v1889 = vmul.f32 %v1801, 0.25
    %v1890 = vmul.f32 %v1808, 0.25
    %v1891 = vmul.f32 %v1815, 0.25
    %v1892 = vmul.f32 %v1822, 0.25
    %v1893 = vmul.f32 %v1829, 0.25
    %v1894 = vmul.f32 %v1836, 0.25
    %v1895 = vmul.f32 %v1843, 0.25
    %v1896 = vmul.f32 %v1850, 0.25
    %v1897 = vmul.f32 %v1857, 0.25
    %v1898 = vmul.f32 %v1864, 0.25
    %v1899 = vmul.f32 %v1871, 0.25
    %v1900 = vmul.f32 %v1878, 0.25
    %v1901 = vmul.f32 %v1885, 0.25
    %v1902 = vmul.f32 %v1742, %v1742
    %v1903 = vmul.f32 %v1743, %v1743
    %v1904 = vmul.f32 %v1744, %v1744
    %v1905 = vmul.f32 %v1745, %v1745
    %v1906 = vmul.f32 %v1746, %v1746
    %v1907 = vmul.f32 %v1747, %v1747
    %v1908 = vmul.f32 %v1748, %v1748
    %v1909 = vmul.f32 %v1749, %v1749
    %v1910 = vmul.f32 %v1750, %v1750
    %v1911 = vmul.f32 %v1751, %v1751
    %v1912 = vmul.f32 %v1752, %v1752
    %v1913 = vmul.f32 %v1753, %v1753
    %v1914 = vmul.f32 %v1754, %v1754
    %v1915 = vmul.f32 %v1755, %v1755
    %v1916 = vmul.f32 %v1756, %v1756
    %v1917 = vmul.f32 %v1757, %v1757
    %v1918 = vsub.f32 %v1886, %v1902
    %v1919 = vsub.f32 %v1887, %v1903
    %v1920 = vsub.f32 %v1888, %v1904
    %v1921 = vsub.f32 %v1889, %v1905
    %v1922 = vsub.f32 %v1890, %v1906
    %v1923 = vsub.f32 %v1891, %v1907
    %v1924 = vsub.f32 %v1892, %v1908
    %v1925 = vsub.f32 %v1893, %v1909
    %v1926 = vsub.f32 %v1894, %v1910
    %v1927 = vsub.f32 %v1895, %v1911
    %v1928 = vsub.f32 %v1896, %v1912
    %v1929 = vsub.f32 %v1897, %v1913
    %v1930 = vsub.f32 %v1898, %v1914
    %v1931 = vsub.f32 %v1899, %v1915
    %v1932 = vsub.f32 %v1900, %v1916
    %v1933 = vsub.f32 %v1901, %v1917
    %v1934 = vmax.f32 %v1918, 0.0
    %v1935 = vmax.f32 %v1919, 0.0
    %v1936 = vmax.f32 %v1920, 0.0
    %v1937 = vmax.f32 %v1921, 0.0
    %v1938 = vmax.f32 %v1922, 0.0
    %v1939 = vmax.f32 %v1923, 0.0
    %v1940 = vmax.f32 %v1924, 0.0
    %v1941 = vmax.f32 %v1925, 0.0
    %v1942 = vmax.f32 %v1926, 0.0
    %v1943 = vmax.f32 %v1927, 0.0
    %v1944 = vmax.f32 %v1928, 0.0
    %v1945 = vmax.f32 %v1929, 0.0
    %v1946 = vmax.f32 %v1930, 0.0
    %v1947 = vmax.f32 %v1931, 0.0
    %v1948 = vmax.f32 %v1932, 0.0
    %v1949 = vmax.f32 %v1933, 0.0
    %v1950 = vld [vmem:[%s2] sm:$0xff]
    %v1951 = vld [vmem:[%s2 + $0x8] sm:$0xff]
    %v1952 = vld [vmem:[%s2 + $0x10] sm:$0xff]
    %v1953 = vld [vmem:[%s2 + $0x18] sm:$0xff]
    %v1954 = vadd.f32 %v1934, 1e-05
    %v1955 = vadd.f32 %v1935, 1e-05
    %v1956 = vadd.f32 %v1936, 1e-05
    %v1957 = vadd.f32 %v1937, 1e-05
    %v1958 = vadd.f32 %v1938, 1e-05
    %v1959 = vadd.f32 %v1939, 1e-05
    %v1960 = vadd.f32 %v1940, 1e-05
    %v1961 = vadd.f32 %v1941, 1e-05
    %v1962 = vadd.f32 %v1942, 1e-05
    %v1963 = vadd.f32 %v1943, 1e-05
    %v1964 = vadd.f32 %v1944, 1e-05
    %v1965 = vadd.f32 %v1945, 1e-05
    %v1966 = vadd.f32 %v1946, 1e-05
    %v1967 = vadd.f32 %v1947, 1e-05
    %v1968 = vadd.f32 %v1948, 1e-05
    %v1969 = vadd.f32 %v1949, 1e-05
    %v1970 = vrsqrt.pop %v1954
    %v1971 = vrsqrt.pop %v1955
    %v1972 = vrsqrt.pop %v1956
    %v1973 = vrsqrt.pop %v1957
    %v1974 = vrsqrt.pop %v1958
    %v1975 = vrsqrt.pop %v1959
    %v1976 = vrsqrt.pop %v1960
    %v1977 = vrsqrt.pop %v1961
    %v1978 = vrsqrt.pop %v1962
    %v1979 = vrsqrt.pop %v1963
    %v1980 = vrsqrt.pop %v1964
    %v1981 = vrsqrt.pop %v1965
    %v1982 = vrsqrt.pop %v1966
    %v1983 = vrsqrt.pop %v1967
    %v1984 = vrsqrt.pop %v1968
    %v1985 = vrsqrt.pop %v1969
    %v2002 = vcombine.low %v1970, %v1971
    %v2003 = vcombine.low %v1972, %v1973
    %v2005 = vunpack.c.l.s4 1983009808
    %v2006 = vunpack.c.0.s8 %v2005
    %v2007 = vlaneseq
    %v2008 = vshrl.u32 %v2007, 7
    %v2009 = vsub.s32 %v2006, %v2008
    %v2010 = vrot.slane %v2002, %v2009
    %v2012 = vunpack.c.l.s4 1983009808
    %v2013 = vunpack.c.0.s8 %v2012
    %v2014 = vlaneseq
    %v2015 = vshrl.u32 %v2014, 7
    %v2016 = vsub.s32 %v2013, %v2015
    %v2017 = vrot.slane %v2003, %v2016
    %v2018 = vcombine.low %v2010, %v2017
    %v2019 = vcombine.low %v1974, %v1975
    %v2020 = vcombine.low %v1976, %v1977
    %v2022 = vunpack.c.l.s4 1983009808
    %v2023 = vunpack.c.0.s8 %v2022
    %v2024 = vlaneseq
    %v2025 = vshrl.u32 %v2024, 7
    %v2026 = vsub.s32 %v2023, %v2025
    %v2027 = vrot.slane %v2019, %v2026
    %v2029 = vunpack.c.l.s4 1983009808
    %v2030 = vunpack.c.0.s8 %v2029
    %v2031 = vlaneseq
    %v2032 = vshrl.u32 %v2031, 7
    %v2033 = vsub.s32 %v2030, %v2032
    %v2034 = vrot.slane %v2020, %v2033
    %v2035 = vcombine.low %v2027, %v2034
    %v2036 = vcombine.low %v1978, %v1979
    %v2037 = vcombine.low %v1980, %v1981
    %v2039 = vunpack.c.l.s4 1983009808
    %v2040 = vunpack.c.0.s8 %v2039
    %v2041 = vlaneseq
    %v2042 = vshrl.u32 %v2041, 7
    %v2043 = vsub.s32 %v2040, %v2042
    %v2044 = vrot.slane %v2036, %v2043
    %v2046 = vunpack.c.l.s4 1983009808
    %v2047 = vunpack.c.0.s8 %v2046
    %v2048 = vlaneseq
    %v2049 = vshrl.u32 %v2048, 7
    %v2050 = vsub.s32 %v2047, %v2049
    %v2051 = vrot.slane %v2037, %v2050
    %v2052 = vcombine.low %v2044, %v2051
    %v2053 = vcombine.low %v1982, %v1983
    %v2054 = vcombine.low %v1984, %v1985
    %v2056 = vunpack.c.l.s4 1983009808
    %v2057 = vunpack.c.0.s8 %v2056
    %v2058 = vlaneseq
    %v2059 = vshrl.u32 %v2058, 7
    %v2060 = vsub.s32 %v2057, %v2059
    %v2061 = vrot.slane %v2053, %v2060
    %v2063 = vunpack.c.l.s4 1983009808
    %v2064 = vunpack.c.0.s8 %v2063
    %v2065 = vlaneseq
    %v2066 = vshrl.u32 %v2065, 7
    %v2067 = vsub.s32 %v2064, %v2066
    %v2068 = vrot.slane %v2054, %v2067
    %v2069 = vcombine.low %v2061, %v2068
    %v2074 = vmul.f32 %v1950, %v2018
    %v2075 = vmul.f32 %v1951, %v2035
    %v2076 = vmul.f32 %v1952, %v2052
    %v2077 = vmul.f32 %v1953, %v2069
    %v2082 = vlaneseq
    %v2083 = vshrl.u32 %v2082, 7
    %v2084 = vsub.s32 0, %v2083
    %v2085 = vrot.slane %v2074, %v2084
    %v2086 = vlaneseq
    %v2087 = vshrl.u32 %v2086, 7
    %v2088 = vsub.s32 2, %v2087
    %v2089 = vrot.slane %v2074, %v2088
    %v2090 = vlaneseq
    %v2091 = vshrl.u32 %v2090, 7
    %v2092 = vsub.s32 4, %v2091
    %v2093 = vrot.slane %v2074, %v2092
    %v2094 = vlaneseq
    %v2095 = vshrl.u32 %v2094, 7
    %v2096 = vsub.s32 6, %v2095
    %v2097 = vrot.slane %v2074, %v2096
    %v2098 = vlaneseq
    %v2099 = vshrl.u32 %v2098, 7
    %v2100 = vsub.s32 0, %v2099
    %v2101 = vrot.slane %v2075, %v2100
    %v2102 = vlaneseq
    %v2103 = vshrl.u32 %v2102, 7
    %v2104 = vsub.s32 2, %v2103
    %v2105 = vrot.slane %v2075, %v2104
    %v2106 = vlaneseq
    %v2107 = vshrl.u32 %v2106, 7
    %v2108 = vsub.s32 4, %v2107
    %v2109 = vrot.slane %v2075, %v2108
    %v2110 = vlaneseq
    %v2111 = vshrl.u32 %v2110, 7
    %v2112 = vsub.s32 6, %v2111
    %v2113 = vrot.slane %v2075, %v2112
    %v2114 = vlaneseq
    %v2115 = vshrl.u32 %v2114, 7
    %v2116 = vsub.s32 0, %v2115
    %v2117 = vrot.slane %v2076, %v2116
    %v2118 = vlaneseq
    %v2119 = vshrl.u32 %v2118, 7
    %v2120 = vsub.s32 2, %v2119
    %v2121 = vrot.slane %v2076, %v2120
    %v2122 = vlaneseq
    %v2123 = vshrl.u32 %v2122, 7
    %v2124 = vsub.s32 4, %v2123
    %v2125 = vrot.slane %v2076, %v2124
    %v2126 = vlaneseq
    %v2127 = vshrl.u32 %v2126, 7
    %v2128 = vsub.s32 6, %v2127
    %v2129 = vrot.slane %v2076, %v2128
    %v2130 = vlaneseq
    %v2131 = vshrl.u32 %v2130, 7
    %v2132 = vsub.s32 0, %v2131
    %v2133 = vrot.slane %v2077, %v2132
    %v2134 = vlaneseq
    %v2135 = vshrl.u32 %v2134, 7
    %v2136 = vsub.s32 2, %v2135
    %v2137 = vrot.slane %v2077, %v2136
    %v2138 = vlaneseq
    %v2139 = vshrl.u32 %v2138, 7
    %v2140 = vsub.s32 4, %v2139
    %v2141 = vrot.slane %v2077, %v2140
    %v2142 = vlaneseq
    %v2143 = vshrl.u32 %v2142, 7
    %v2144 = vsub.s32 6, %v2143
    %v2145 = vrot.slane %v2077, %v2144
    %v2162 = vmul.f32 %v1742, %v2085
    %v2163 = vmul.f32 %v1743, %v2089
    %v2164 = vmul.f32 %v1744, %v2093
    %v2165 = vmul.f32 %v1745, %v2097
    %v2166 = vmul.f32 %v1746, %v2101
    %v2167 = vmul.f32 %v1747, %v2105
    %v2168 = vmul.f32 %v1748, %v2109
    %v2169 = vmul.f32 %v1749, %v2113
    %v2170 = vmul.f32 %v1750, %v2117
    %v2171 = vmul.f32 %v1751, %v2121
    %v2172 = vmul.f32 %v1752, %v2125
    %v2173 = vmul.f32 %v1753, %v2129
    %v2174 = vmul.f32 %v1754, %v2133
    %v2175 = vmul.f32 %v1755, %v2137
    %v2176 = vmul.f32 %v1756, %v2141
    %v2177 = vmul.f32 %v1757, %v2145
    %v2194 = vcombine.low %v2162, %v2163
    %v2195 = vcombine.low %v2164, %v2165
    %v2197 = vunpack.c.l.s4 1983009808
    %v2198 = vunpack.c.0.s8 %v2197
    %v2199 = vlaneseq
    %v2200 = vshrl.u32 %v2199, 7
    %v2201 = vsub.s32 %v2198, %v2200
    %v2202 = vrot.slane %v2194, %v2201
    %v2204 = vunpack.c.l.s4 1983009808
    %v2205 = vunpack.c.0.s8 %v2204
    %v2206 = vlaneseq
    %v2207 = vshrl.u32 %v2206, 7
    %v2208 = vsub.s32 %v2205, %v2207
    %v2209 = vrot.slane %v2195, %v2208
    %v2210 = vcombine.low %v2202, %v2209
    %v2211 = vcombine.low %v2166, %v2167
    %v2212 = vcombine.low %v2168, %v2169
    %v2214 = vunpack.c.l.s4 1983009808
    %v2215 = vunpack.c.0.s8 %v2214
    %v2216 = vlaneseq
    %v2217 = vshrl.u32 %v2216, 7
    %v2218 = vsub.s32 %v2215, %v2217
    %v2219 = vrot.slane %v2211, %v2218
    %v2221 = vunpack.c.l.s4 1983009808
    %v2222 = vunpack.c.0.s8 %v2221
    %v2223 = vlaneseq
    %v2224 = vshrl.u32 %v2223, 7
    %v2225 = vsub.s32 %v2222, %v2224
    %v2226 = vrot.slane %v2212, %v2225
    %v2227 = vcombine.low %v2219, %v2226
    %v2228 = vcombine.low %v2170, %v2171
    %v2229 = vcombine.low %v2172, %v2173
    %v2231 = vunpack.c.l.s4 1983009808
    %v2232 = vunpack.c.0.s8 %v2231
    %v2233 = vlaneseq
    %v2234 = vshrl.u32 %v2233, 7
    %v2235 = vsub.s32 %v2232, %v2234
    %v2236 = vrot.slane %v2228, %v2235
    %v2238 = vunpack.c.l.s4 1983009808
    %v2239 = vunpack.c.0.s8 %v2238
    %v2240 = vlaneseq
    %v2241 = vshrl.u32 %v2240, 7
    %v2242 = vsub.s32 %v2239, %v2241
    %v2243 = vrot.slane %v2229, %v2242
    %v2244 = vcombine.low %v2236, %v2243
    %v2245 = vcombine.low %v2174, %v2175
    %v2246 = vcombine.low %v2176, %v2177
    %v2248 = vunpack.c.l.s4 1983009808
    %v2249 = vunpack.c.0.s8 %v2248
    %v2250 = vlaneseq
    %v2251 = vshrl.u32 %v2250, 7
    %v2252 = vsub.s32 %v2249, %v2251
    %v2253 = vrot.slane %v2245, %v2252
    %v2255 = vunpack.c.l.s4 1983009808
    %v2256 = vunpack.c.0.s8 %v2255
    %v2257 = vlaneseq
    %v2258 = vshrl.u32 %v2257, 7
    %v2259 = vsub.s32 %v2256, %v2258
    %v2260 = vrot.slane %v2246, %v2259
    %v2261 = vcombine.low %v2253, %v2260
    %v2262 = vrot.slane %v2210, 7
    %v2263 = vrot.slane %v2227, 7
    %v2264 = vrot.slane %v2244, 7
    %v2265 = vrot.slane %v2261, 7
    %v2270 = vsub.f32 %v1950, %v2262
    %v2271 = vsub.f32 %v1951, %v2263
    %v2272 = vsub.f32 %v1952, %v2264
    %v2273 = vsub.f32 %v1953, %v2265
    %v2274 = vlaneseq
    %v2275 = vshrl.u32 %v2274, 7
    %v2276 = vsub.s32 0, %v2275
    %v2277 = vrot.slane %v2085, %v2276
    %v2278 = vlaneseq
    %v2279 = vshrl.u32 %v2278, 7
    %v2280 = vsub.s32 0, %v2279
    %v2281 = vrot.slane %v2089, %v2280
    %v2282 = vlaneseq
    %v2283 = vshrl.u32 %v2282, 7
    %v2284 = vsub.s32 0, %v2283
    %v2285 = vrot.slane %v2093, %v2284
    %v2286 = vlaneseq
    %v2287 = vshrl.u32 %v2286, 7
    %v2288 = vsub.s32 0, %v2287
    %v2289 = vrot.slane %v2097, %v2288
    %v2290 = vlaneseq
    %v2291 = vshrl.u32 %v2290, 7
    %v2292 = vsub.s32 0, %v2291
    %v2293 = vrot.slane %v2101, %v2292
    %v2294 = vlaneseq
    %v2295 = vshrl.u32 %v2294, 7
    %v2296 = vsub.s32 0, %v2295
    %v2297 = vrot.slane %v2105, %v2296
    %v2298 = vlaneseq
    %v2299 = vshrl.u32 %v2298, 7
    %v2300 = vsub.s32 0, %v2299
    %v2301 = vrot.slane %v2109, %v2300
    %v2302 = vlaneseq
    %v2303 = vshrl.u32 %v2302, 7
    %v2304 = vsub.s32 0, %v2303
    %v2305 = vrot.slane %v2113, %v2304
    %v2306 = vlaneseq
    %v2307 = vshrl.u32 %v2306, 7
    %v2308 = vsub.s32 0, %v2307
    %v2309 = vrot.slane %v2117, %v2308
    %v2310 = vlaneseq
    %v2311 = vshrl.u32 %v2310, 7
    %v2312 = vsub.s32 0, %v2311
    %v2313 = vrot.slane %v2121, %v2312
    %v2314 = vlaneseq
    %v2315 = vshrl.u32 %v2314, 7
    %v2316 = vsub.s32 0, %v2315
    %v2317 = vrot.slane %v2125, %v2316
    %v2318 = vlaneseq
    %v2319 = vshrl.u32 %v2318, 7
    %v2320 = vsub.s32 0, %v2319
    %v2321 = vrot.slane %v2129, %v2320
    %v2322 = vlaneseq
    %v2323 = vshrl.u32 %v2322, 7
    %v2324 = vsub.s32 0, %v2323
    %v2325 = vrot.slane %v2133, %v2324
    %v2326 = vlaneseq
    %v2327 = vshrl.u32 %v2326, 7
    %v2328 = vsub.s32 0, %v2327
    %v2329 = vrot.slane %v2137, %v2328
    %v2330 = vlaneseq
    %v2331 = vshrl.u32 %v2330, 7
    %v2332 = vsub.s32 0, %v2331
    %v2333 = vrot.slane %v2141, %v2332
    %v2334 = vlaneseq
    %v2335 = vshrl.u32 %v2334, 7
    %v2336 = vsub.s32 0, %v2335
    %v2337 = vrot.slane %v2145, %v2336
    %v2338 = vmul.f32 %v1336, %v2277
    %v2339 = vmul.f32 %v1338, %v2281
    %v2340 = vmul.f32 %v1377, %v2285
    %v2341 = vmul.f32 %v1379, %v2289
    %v2342 = vmul.f32 %v1418, %v2293
    %v2343 = vmul.f32 %v1420, %v2297
    %v2344 = vmul.f32 %v1459, %v2301
    %v2345 = vmul.f32 %v1461, %v2305
    %v2346 = vmul.f32 %v1500, %v2309
    %v2347 = vmul.f32 %v1502, %v2313
    %v2348 = vmul.f32 %v1541, %v2317
    %v2349 = vmul.f32 %v1543, %v2321
    %v2350 = vmul.f32 %v1582, %v2325
    %v2351 = vmul.f32 %v1584, %v2329
    %v2352 = vmul.f32 %v1623, %v2333
    %v2353 = vmul.f32 %v1625, %v2337
    %v2358 = vlaneseq
    %v2359 = vshrl.u32 %v2358, 7
    %v2360 = vsub.s32 1, %v2359
    %v2361 = vrot.slane %v2270, %v2360
    %v2362 = vlaneseq
    %v2363 = vshrl.u32 %v2362, 7
    %v2364 = vsub.s32 3, %v2363
    %v2365 = vrot.slane %v2270, %v2364
    %v2366 = vlaneseq
    %v2367 = vshrl.u32 %v2366, 7
    %v2368 = vsub.s32 5, %v2367
    %v2369 = vrot.slane %v2270, %v2368
    %v2370 = vlaneseq
    %v2371 = vshrl.u32 %v2370, 7
    %v2372 = vsub.s32 7, %v2371
    %v2373 = vrot.slane %v2270, %v2372
    %v2374 = vlaneseq
    %v2375 = vshrl.u32 %v2374, 7
    %v2376 = vsub.s32 1, %v2375
    %v2377 = vrot.slane %v2271, %v2376
    %v2378 = vlaneseq
    %v2379 = vshrl.u32 %v2378, 7
    %v2380 = vsub.s32 3, %v2379
    %v2381 = vrot.slane %v2271, %v2380
    %v2382 = vlaneseq
    %v2383 = vshrl.u32 %v2382, 7
    %v2384 = vsub.s32 5, %v2383
    %v2385 = vrot.slane %v2271, %v2384
    %v2386 = vlaneseq
    %v2387 = vshrl.u32 %v2386, 7
    %v2388 = vsub.s32 7, %v2387
    %v2389 = vrot.slane %v2271, %v2388
    %v2390 = vlaneseq
    %v2391 = vshrl.u32 %v2390, 7
    %v2392 = vsub.s32 1, %v2391
    %v2393 = vrot.slane %v2272, %v2392
    %v2394 = vlaneseq
    %v2395 = vshrl.u32 %v2394, 7
    %v2396 = vsub.s32 3, %v2395
    %v2397 = vrot.slane %v2272, %v2396
    %v2398 = vlaneseq
    %v2399 = vshrl.u32 %v2398, 7
    %v2400 = vsub.s32 5, %v2399
    %v2401 = vrot.slane %v2272, %v2400
    %v2402 = vlaneseq
    %v2403 = vshrl.u32 %v2402, 7
    %v2404 = vsub.s32 7, %v2403
    %v2405 = vrot.slane %v2272, %v2404
    %v2406 = vlaneseq
    %v2407 = vshrl.u32 %v2406, 7
    %v2408 = vsub.s32 1, %v2407
    %v2409 = vrot.slane %v2273, %v2408
    %v2410 = vlaneseq
    %v2411 = vshrl.u32 %v2410, 7
    %v2412 = vsub.s32 3, %v2411
    %v2413 = vrot.slane %v2273, %v2412
    %v2414 = vlaneseq
    %v2415 = vshrl.u32 %v2414, 7
    %v2416 = vsub.s32 5, %v2415
    %v2417 = vrot.slane %v2273, %v2416
    %v2418 = vlaneseq
    %v2419 = vshrl.u32 %v2418, 7
    %v2420 = vsub.s32 7, %v2419
    %v2421 = vrot.slane %v2273, %v2420
    %v2438 = vlaneseq
    %v2439 = vshrl.u32 %v2438, 7
    %v2440 = vsub.s32 1, %v2439
    %v2441 = vrot.slane %v2361, %v2440
    %v2442 = vlaneseq
    %v2443 = vshrl.u32 %v2442, 7
    %v2444 = vsub.s32 1, %v2443
    %v2445 = vrot.slane %v2365, %v2444
    %v2446 = vlaneseq
    %v2447 = vshrl.u32 %v2446, 7
    %v2448 = vsub.s32 1, %v2447
    %v2449 = vrot.slane %v2369, %v2448
    %v2450 = vlaneseq
    %v2451 = vshrl.u32 %v2450, 7
    %v2452 = vsub.s32 1, %v2451
    %v2453 = vrot.slane %v2373, %v2452
    %v2454 = vlaneseq
    %v2455 = vshrl.u32 %v2454, 7
    %v2456 = vsub.s32 1, %v2455
    %v2457 = vrot.slane %v2377, %v2456
    %v2458 = vlaneseq
    %v2459 = vshrl.u32 %v2458, 7
    %v2460 = vsub.s32 1, %v2459
    %v2461 = vrot.slane %v2381, %v2460
    %v2462 = vlaneseq
    %v2463 = vshrl.u32 %v2462, 7
    %v2464 = vsub.s32 1, %v2463
    %v2465 = vrot.slane %v2385, %v2464
    %v2466 = vlaneseq
    %v2467 = vshrl.u32 %v2466, 7
    %v2468 = vsub.s32 1, %v2467
    %v2469 = vrot.slane %v2389, %v2468
    %v2470 = vlaneseq
    %v2471 = vshrl.u32 %v2470, 7
    %v2472 = vsub.s32 1, %v2471
    %v2473 = vrot.slane %v2393, %v2472
    %v2474 = vlaneseq
    %v2475 = vshrl.u32 %v2474, 7
    %v2476 = vsub.s32 1, %v2475
    %v2477 = vrot.slane %v2397, %v2476
    %v2478 = vlaneseq
    %v2479 = vshrl.u32 %v2478, 7
    %v2480 = vsub.s32 1, %v2479
    %v2481 = vrot.slane %v2401, %v2480
    %v2482 = vlaneseq
    %v2483 = vshrl.u32 %v2482, 7
    %v2484 = vsub.s32 1, %v2483
    %v2485 = vrot.slane %v2405, %v2484
    %v2486 = vlaneseq
    %v2487 = vshrl.u32 %v2486, 7
    %v2488 = vsub.s32 1, %v2487
    %v2489 = vrot.slane %v2409, %v2488
    %v2490 = vlaneseq
    %v2491 = vshrl.u32 %v2490, 7
    %v2492 = vsub.s32 1, %v2491
    %v2493 = vrot.slane %v2413, %v2492
    %v2494 = vlaneseq
    %v2495 = vshrl.u32 %v2494, 7
    %v2496 = vsub.s32 1, %v2495
    %v2497 = vrot.slane %v2417, %v2496
    %v2498 = vlaneseq
    %v2499 = vshrl.u32 %v2498, 7
    %v2500 = vsub.s32 1, %v2499
    %v2501 = vrot.slane %v2421, %v2500
    %v2502 = vadd.f32 %v2338, %v2441
    %v2503 = vadd.f32 %v2339, %v2445
    %v2504 = vadd.f32 %v2340, %v2449
    %v2505 = vadd.f32 %v2341, %v2453
    %v2506 = vadd.f32 %v2342, %v2457
    %v2507 = vadd.f32 %v2343, %v2461
    %v2508 = vadd.f32 %v2344, %v2465
    %v2509 = vadd.f32 %v2345, %v2469
    %v2510 = vadd.f32 %v2346, %v2473
    %v2511 = vadd.f32 %v2347, %v2477
    %v2512 = vadd.f32 %v2348, %v2481
    %v2513 = vadd.f32 %v2349, %v2485
    %v2514 = vadd.f32 %v2350, %v2489
    %v2515 = vadd.f32 %v2351, %v2493
    %v2516 = vadd.f32 %v2352, %v2497
    %v2517 = vadd.f32 %v2353, %v2501
    %v2534 = vcombine.low %v2502, %v2503
    %v2535 = vcombine.low %v2504, %v2505
    %v2536 = vcombine.low %v2506, %v2507
    %v2537 = vcombine.low %v2508, %v2509
    %v2538 = vcombine.low %v2510, %v2511
    %v2539 = vcombine.low %v2512, %v2513
    %v2540 = vcombine.low %v2514, %v2515
    %v2541 = vcombine.low %v2516, %v2517
    %2550 = vst [vmem:[#allocation2] sm:$0xff] %v2534
    %2551 = vst [vmem:[#allocation2 + $0x8] sm:$0xff] %v2535
    %2552 = vst [vmem:[#allocation2 + $0x10] sm:$0xff] %v2536
    %2553 = vst [vmem:[#allocation2 + $0x18] sm:$0xff] %v2537
    %2554 = vst [vmem:[#allocation2 + $0x20] sm:$0xff] %v2538
    %2555 = vst [vmem:[#allocation2 + $0x28] sm:$0xff] %v2539
    %2556 = vst [vmem:[#allocation2 + $0x30] sm:$0xff] %v2540
    %2557 = vst [vmem:[#allocation2 + $0x38] sm:$0xff] %v2541
    // Predicated region
    $region14: #{tpu_custom_call.1} parent=1 // pred_check
      _
    $region15: #{tpu_custom_call.1} parent=1 // pred_check_branch
      %2559 = sbr.rel (0) target = $region17
    $region16: #{tpu_custom_call.1} parent=1 // pred_region
      %s2561 = ssub.s32 1024, 1024
      %2562 = vsyncadd [#allocation3], %s2561
      %s2564 = sshll.u32 [#allocation2], 4
      %s2565 = int_to_ptr.vmem [resolvable:$true] %s2564
      %2567 = dma.vmem_to_hbm [thread:$0]  %s2565, 1024, %s3, [#allocation3]
    $region17: #{tpu_custom_call.1} parent=1 // pred_fallthru
      _
    // Predicated region
    $region18: #{tpu_custom_call.1} parent=1 // pred_check
      _
    $region19: #{tpu_custom_call.1} parent=1 // pred_check_branch
      %2569 = sbr.rel (0) target = $region21
    $region20: #{tpu_custom_call.1} parent=1 // pred_region
      %2570 = dma.done [#allocation3], 1024
    $region21: #{tpu_custom_call.1} parent=1 // pred_fallthru
      _
    %2571 = vsyncpa [#allocation3], 1

</llo_original>
